<compile_context>
chip_gen: v7x
topology: tpu7x:2x2x1
jax: 0.10.0
libtpu: 0.0.40
codegen_flags: <defaults>
</compile_context>

<pallas_src>
import functools

import numpy as np
import jax
import jax.numpy as jnp
from jax import lax
from jax.experimental import pallas as pl
from jax.experimental.pallas import tpu as pltpu


def _median_bias(n: int) -> float:
    # scipy.signal._spectral_py._median_bias
    ii_2 = 2.0 * np.arange(1.0, (n - 1) // 2 + 1)
    return float(1.0 + np.sum(1.0 / (ii_2 + 1.0) - 1.0 / ii_2))


def normalize_frequencies(freq_low, freq_high):
    if isinstance(freq_low, (int, float)):
        freq_low = [float(freq_low)]
    if isinstance(freq_high, (int, float)):
        freq_high = [float(freq_high)]
    if len(freq_low) != len(freq_high):
        raise ValueError("freq_low and freq_high must have the same length")
    for lo, hi in zip(freq_low, freq_high):
        if lo >= hi:
            raise ValueError(f"freq_low {lo} must be < freq_high {hi}")
    return list(freq_low), list(freq_high)


def _vmem_budget_bytes():
    """Generation-aware VMEM budget; conservative fallback for v7x/unknown."""
    try:
        kind = jax.devices()[0].device_kind.lower()
    except Exception:
        kind = ""
    if ("v4" in kind) or ("v5" in kind) or ("v6" in kind):
        return 100 * 1024 * 1024          # 128 MiB physical VMEM parts
    return 48 * 1024 * 1024               # v7x (64 MiB) and unknown: safe


def psd_loss_kernel(seg_ref, dft_ref, mask_ref, out_ref, *,
                    nseg, nseg_pow, bt, asd):
    """One frequency tile x one batch group of bt batch elements.

    seg_ref : (2*bt*nseg_pow, nperseg) bf16
              rows [0 : bt*nseg_pow)        = residual segments (batch-major),
              rows [bt*nseg_pow : 2*bt*...) = target segments.
    dft_ref : (nperseg, 2*f_tile) bf16  columns [cos_tile | sin_tile], Hann folded in.
    mask_ref: (1, f_tile)         f32   1.0 on selected bins (0 on pad lanes).
    out_ref : (bt, f_tile)        f32   masked per-(batch, bin) PSD ratio.
    """
    f_tile = mask_ref.shape[-1]
    m_rows = 2 * bt * nseg_pow

    # Single bf16 MXU matmul (f32 accumulation): rFFT of residual AND target
    # segments of all bt batch elements at once (M-dim filled).
    r = jnp.dot(seg_ref[...], dft_ref[...],
                preferred_element_type=jnp.float32)     # (m_rows, 2*f_tile)
    re = r[:, :f_tile]
    im = r[:, f_tile:]
    p = re * re + im * im                               # |FFT|^2, f32

    # Static row bookkeeping: index of each row inside its nseg_pow-row group.
    row = lax.broadcasted_iota(jnp.int32, (m_rows, 1), 0)
    sid = row & (nseg_pow - 1)

    # Pad segments (rows >= nseg inside each group) -> large finite sentinel so
    # they sort to the end of their group (finite so sentinel * 0 == 0 later).
    sentinel = jnp.float32(np.finfo(np.float32).max)
    p = jnp.where(sid < nseg, p, sentinel)

    # Bitonic sort of every aligned nseg_pow-row group, all groups in lockstep.
    # Partners are fetched with global sublane rotations (XLU slot, not VALU);
    # with groups aligned to power-of-two boundaries, i ^ j never leaves the
    # group, so the global roll always supplies the in-group partner.
    k = 2
    while k <= nseg_pow:
        j = k // 2
        while j >= 1:
            bit_j = (sid & j) != 0
            bit_k = (sid & k) != 0
            keep_min = bit_j == bit_k
            up = pltpu.roll(p, m_rows - j, axis=0)      # row i <- row i + j
            dn = pltpu.roll(p, j, axis=0)               # row i <- row i - j
            partner = jnp.where(bit_j, dn, up)
            p = jnp.where(keep_min,
                          jnp.minimum(p, partner),
                          jnp.maximum(p, partner))
            j //= 2
        k *= 2

    # Median = mean of the two central order statistics (torch.quantile(0.5)).
    k_lo = (nseg - 1) // 2
    k_hi = nseg // 2
    w_lo = (sid == k_lo).astype(jnp.float32)
    if k_lo == k_hi:
        w = w_lo
    else:
        w = 0.5 * (w_lo + (sid == k_hi).astype(jnp.float32))
    pw = p * w                                          # sentinel rows: w == 0
    p4 = pw.reshape(2, bt, nseg_pow, f_tile)            # tile-aligned split
    med = jnp.sum(p4, axis=2)                           # (2, bt, f_tile)
    med_res = med[0]
    med_tgt = med[1]

    # Welch scale, one-sided doubling and the median-bias correction are
    # identical positive per-bin factors on numerator and denominator, so they
    # cancel exactly in the PSD ratio and are omitted here.
    m = mask_ref[...]                                   # (1, f_tile)
    safe = jnp.where(med_tgt > 0.0, med_tgt, 1.0)
    ratio = (m * med_res) * pl.reciprocal(safe, approx=True)
    if asd:
        ratio = jnp.sqrt(ratio)
    out_ref[...] = ratio


class PSDLossPallas:
    """Pallas TPU implementation of deepclean PSDLoss (fast stft/median path)."""

    def __init__(self, sample_rate, fftlength, overlap,
                 asd=False, freq_low=None, freq_high=None,
                 f_tile_max=1024, vmem_limit_bytes=None):
        if overlap >= fftlength:
            raise ValueError("overlap must be shorter than fftlength")
        self.sample_rate = float(sample_rate)
        self.nperseg = int(fftlength * sample_rate)
        self.nstride = self.nperseg - int(overlap * sample_rate)
        self.asd = bool(asd)

        n = self.nperseg
        # torch.hann_window(N) is periodic
        window = 0.5 * (1.0 - np.cos(2.0 * np.pi * np.arange(n) / n))
        self.window = window
        self.scale = float(1.0 / (sample_rate * np.sum(window ** 2)))

        if freq_low is None or freq_high is None:
            # TODO(synk): mask=None / standard (per-segment demeaned) Welch path
            # not implemented; this kernel covers the fast-CSD (stft) path.
            raise NotImplementedError("frequency mask required for this kernel")

        low, high = normalize_frequencies(freq_low, freq_high)
        dfreq = 1.0 / fftlength
        freqs = np.arange(0.0, sample_rate / 2 + dfreq, dfreq)
        mask = np.zeros_like(freqs, dtype=bool)
        for lo, hi in zip(low, high):
            mask |= (lo <= freqs) & (freqs < hi)
        if mask[:2].any():
            # TODO(synk): non-fast Welch path (mask touches DC bins) not implemented.
            raise NotImplementedError("only the fast (stft) Welch path is implemented")
        self.mask = mask

        nfreq = n // 2 + 1
        self.nfreq = nfreq
        f0 = ((nfreq + 127) // 128) * 128             # lane-pad frequency bins

        # ---- VMEM budget & frequency tile size (generation aware) ----
        budget = int(vmem_limit_bytes) if vmem_limit_bytes else _vmem_budget_bytes()
        self.vmem_limit = budget

        def _est(ft):
            m_assume = 512                             # target matmul M rows
            dft_b = 2 * (n * 2 * ft * 2)               # double-buffered bf16 DFT
            seg_b = 2 * (m_assume * n * 2)             # double-buffered bf16 segs
            work = 10 * m_assume * ft * 4              # r/p/sort f32 working set
            out_b = 2 * (64 * ft * 4)
            return dft_b + seg_b + work + out_b

        f_tile = 128
        cand = 256
        limit = min(int(f_tile_max), f0)
        while cand <= limit:
            if _est(cand) <= int(budget * 0.85):
                f_tile = cand
            cand += 128
        self.f_tile = min(f_tile, f0)
        self.F = ((f0 + self.f_tile - 1) // self.f_tile) * self.f_tile

        self.n_masked = int(mask[:nfreq].sum())
        if self.n_masked == 0:
            raise ValueError("frequency mask selects no bins")

        # Window-folded DFT matrices, interleaved per frequency tile:
        # columns [2*t*f_tile : 2*t*f_tile+f_tile]     = window * cos (tile t)
        # columns [2*t*f_tile+f_tile : 2*(t+1)*f_tile] = window * sin (tile t)
        t_idx = np.arange(n)[:, None].astype(np.float64)
        f_idx = np.arange(nfreq)[None, :].astype(np.float64)
        ang = 2.0 * np.pi * t_idx * f_idx / n
        cosw = np.zeros((n, self.F), np.float64)
        sinw = np.zeros((n, self.F), np.float64)
        cosw[:, :nfreq] = window[:, None] * np.cos(ang)
        sinw[:, :nfreq] = window[:, None] * np.sin(ang)

        dft = np.zeros((n, 2 * self.F), np.float32)
        for ti in range(self.F // self.f_tile):
            c0 = 2 * ti * self.f_tile
            cols = slice(ti * self.f_tile, (ti + 1) * self.f_tile)
            dft[:, c0:c0 + self.f_tile] = cosw[:, cols]
            dft[:, c0 + self.f_tile:c0 + 2 * self.f_tile] = sinw[:, cols]
        # bf16 MXU operands (f32 accumulation in-kernel); halves constant HBM/VMEM.
        # TODO(synk): expose an f32-DFT option if training-signal bias matters.
        self.dft = jnp.asarray(dft, jnp.bfloat16)

        maskf = np.zeros((1, self.F), np.float32)
        maskf[0, :nfreq] = mask[:nfreq].astype(np.float32)
        self.maskf = jnp.asarray(maskf)

    def __call__(self, pred, target):
        if pred.shape != target.shape:
            raise ValueError("pred and target must have the same shape")
        B, T = target.shape
        if T < self.nperseg:
            raise ValueError("input too short for nperseg")

        nseg = (T - self.nperseg) // self.nstride + 1
        nseg_pow = max(8, 1 << (nseg - 1).bit_length())  # pow2, >= 8 (sublane tile)

        # Batch tile: fill the MXU M dim (target >= 256 rows) without exceeding
        # B or a ~8 MB segment block (keeps double-buffering comfortable).
        rows_per_b = 2 * nseg_pow
        bt = max(1, min(B, 256 // rows_per_b if rows_per_b < 256 else 1))
        max_bt_vmem = max(1, (8 * 1024 * 1024) // (rows_per_b * self.nperseg * 2))
        bt = max(1, min(bt, max_bt_vmem))
        n_bg = -(-B // bt)
        B_pad = n_bg * bt
        m_rows = 2 * bt * nseg_pow

        idx = (np.arange(nseg)[:, None] * self.nstride
               + np.arange(self.nperseg)[None, :])

        def prep(x):
            # fast-CSD path: demean the *full* series (f32), then unfold.
            x = x.astype(jnp.float32)
            x = x - jnp.mean(x, axis=-1, keepdims=True)
            segs = x[:, idx]                              # (B, nseg, nperseg)
            segs = jnp.pad(segs, ((0, B_pad - B),
                                  (0, nseg_pow - nseg),
                                  (0, 0)))
            return segs.reshape(n_bg, bt * nseg_pow, self.nperseg)

        # Rows per batch group: [residual segs of bt elems | target segs of bt elems]
        segs = jnp.concatenate([prep(target - pred), prep(target)], axis=1)
        segs = segs.astype(jnp.bfloat16)                  # (n_bg, m_rows, nperseg)

        n_ftiles = self.F // self.f_tile
        kernel = functools.partial(
            psd_loss_kernel, nseg=nseg, nseg_pow=nseg_pow, bt=bt, asd=self.asd)

        out = pl.pallas_call(
            kernel,
            out_shape=jax.ShapeDtypeStruct((n_bg, bt, self.F), jnp.float32),
            # freq tile OUTER, batch group inner: each DFT tile is DMA'd once
            # per ft and reused across all batch groups (block index constant
            # along the inner axis).
            grid=(n_ftiles, n_bg),
            in_specs=[
                pl.BlockSpec((None, m_rows, self.nperseg),
                             lambda ft, g: (g, 0, 0)),
                pl.BlockSpec((self.nperseg, 2 * self.f_tile),
                             lambda ft, g: (0, ft)),
                pl.BlockSpec((1, self.f_tile), lambda ft, g: (0, ft)),
            ],
            # disjoint lane-dense per-(ft, g) blocks; all reductions in XLA
            out_specs=pl.BlockSpec((None, bt, self.f_tile),
                                   lambda ft, g: (g, 0, ft)),
            compiler_params=pltpu.CompilerParams(
                dimension_semantics=("parallel", "parallel"),
                vmem_limit_bytes=self.vmem_limit),
        )(segs, self.dft, self.maskf)

        # (n_bg, bt, F) -> per-batch masked-ratio means -> mean over real batch
        per_batch = out.reshape(B_pad, self.F)[:B].sum(axis=-1) / self.n_masked
        return jnp.mean(per_batch)


def reference_loss(pred, target, mod: PSDLossPallas):
    """Pure-JAX reference matching the fast-CSD / median Welch path."""
    nperseg, nstride = mod.nperseg, mod.nstride
    window = mod.window

    def welch_fast(x):
        x = x - jnp.mean(x, axis=-1, keepdims=True)
        T = x.shape[-1]
        nseg = (T - nperseg) // nstride + 1
        idx = np.arange(nseg)[:, None] * nstride + np.arange(nperseg)[None, :]
        segs = x[:, idx] * window
        p = jnp.abs(jnp.fft.rfft(segs, axis=-1)) ** 2
        if nperseg % 2 == 0:
            p = p.at[..., 1:-1].multiply(2.0)
        else:
            p = p.at[..., 1:].multiply(2.0)
        p = p * mod.scale
        med = jnp.median(p, axis=1)
        return med / _median_bias(nseg)

    psd_res = welch_fast(target - pred)
    psd_tgt = welch_fast(target)
    m = np.asarray(mod.mask[:psd_res.shape[-1]])
    ratio = psd_res[:, m] / psd_tgt[:, m]
    if mod.asd:
        ratio = jnp.sqrt(ratio)
    return jnp.mean(ratio)


if __name__ == "__main__":
    key = jax.random.PRNGKey(0)
    B, T = 2, 512                      # 2 series of 4 s at 128 Hz
    sample_rate, fftlength, overlap = 128.0, 0.5, 0.25  # nperseg=64, nstride=32

    k1, k2 = jax.random.split(key)
    target = jax.random.normal(k1, (B, T), jnp.float32)
    pred = target + 0.1 * jax.random.normal(k2, (B, T), jnp.float32)

    loss_mod = PSDLossPallas(sample_rate, fftlength, overlap,
                             asd=False, freq_low=10.0, freq_high=50.0)

    loss = jax.block_until_ready(loss_mod(pred, target))
    ref = jax.block_until_ready(reference_loss(pred, target, loss_mod))

    assert np.isfinite(float(loss)), "kernel produced non-finite loss"
    np.testing.assert_allclose(float(loss), float(ref), rtol=5e-2, atol=1e-6)
    print("KERNEL_OK")
</pallas_src>

<mosaic_0001>
module attributes {stable_mosaic.version = 11 : i64} {
  func.func @psd_loss_kernel(%arg0: i32, %arg1: i32, %arg2: memref<1x64x64xbf16, #tpu.memory_space<vmem>>, %arg3: memref<64x256xbf16, #tpu.memory_space<vmem>>, %arg4: memref<1x128xf32, #tpu.memory_space<vmem>>, %arg5: memref<1x2x128xf32, #tpu.memory_space<vmem>>) attributes {dimension_semantics = [#tpu.dimension_semantics<parallel>, #tpu.dimension_semantics<parallel>], iteration_bounds = array<i64: 1, 1>, scalar_prefetch = 0 : i64, scratch_operands = 0 : i64, tpu.core_type = #tpu.core_type<tc>, window_params = [{transform_indices = @transform_0, window_bounds = array<i64: 1, 64, 64>}, {transform_indices = @transform_1, window_bounds = array<i64: 64, 256>}, {transform_indices = @transform_2, window_bounds = array<i64: 1, 128>}, {transform_indices = @transform_3, window_bounds = array<i64: 1, 2, 128>}]} {
    %c0 = arith.constant 0 : index
    %c0_0 = arith.constant 0 : index
    %c0_1 = arith.constant 0 : index
    %0 = vector.load %arg2[%c0, %c0_0, %c0_1] : memref<1x64x64xbf16, #tpu.memory_space<vmem>>, vector<1x64x64xbf16>
    %1 = vector.shape_cast %0 : vector<1x64x64xbf16> to vector<64x64xbf16>
    %c0_2 = arith.constant 0 : index
    %c0_3 = arith.constant 0 : index
    %2 = vector.load %arg3[%c0_2, %c0_3] : memref<64x256xbf16, #tpu.memory_space<vmem>>, vector<64x256xbf16>
    %cst = arith.constant dense<0.000000e+00> : vector<64x256xf32>
    %3 = tpu.matmul %1, %2, %cst {dimension_numbers = #tpu.dot_dimension_numbers<[1], [0], [0], [1], [0, 0, 1, 1], [], []>} : vector<64x64xbf16>, vector<64x256xbf16>, vector<64x256xf32> -> vector<64x256xf32>
    %4 = vector.extract_strided_slice %3 {offsets = [0, 0], sizes = [64, 128], strides = [1, 1]} : vector<64x256xf32> to vector<64x128xf32>
    %5 = vector.extract_strided_slice %3 {offsets = [0, 128], sizes = [64, 128], strides = [1, 1]} : vector<64x256xf32> to vector<64x128xf32>
    %6 = arith.mulf %4, %4 : vector<64x128xf32>
    %7 = arith.mulf %5, %5 : vector<64x128xf32>
    %8 = arith.addf %6, %7 : vector<64x128xf32>
    %9 = tpu.iota {dimensions = array<i32: 0>} : vector<64x1xi32>
    %c15_i32 = arith.constant 15 : i32
    %10 = vector.broadcast %c15_i32 : i32 to vector<64x1xi32>
    %11 = arith.andi %9, %10 : vector<64x1xi32>
    %c15_i32_4 = arith.constant 15 : i32
    %12 = vector.broadcast %c15_i32_4 : i32 to vector<64x1xi32>
    %13 = arith.cmpi slt, %11, %12 : vector<64x1xi32>
    %cst_5 = arith.constant 3.40282347E+38 : f32
    %14 = vector.shape_cast %13 : vector<64x1xi1> to vector<64x1xi1>
    %15 = vector.broadcast %14 : vector<64x1xi1> to vector<64x128xi1>
    %16 = vector.broadcast %cst_5 : f32 to vector<64x128xf32>
    %17 = arith.select %15, %8, %16 : vector<64x128xi1>, vector<64x128xf32>
    %c1_i32 = arith.constant 1 : i32
    %18 = vector.broadcast %c1_i32 : i32 to vector<64x1xi32>
    %19 = arith.andi %11, %18 : vector<64x1xi32>
    %c0_i32 = arith.constant 0 : i32
    %20 = vector.broadcast %c0_i32 : i32 to vector<64x1xi32>
    %21 = arith.cmpi ne, %19, %20 : vector<64x1xi32>
    %c2_i32 = arith.constant 2 : i32
    %22 = vector.broadcast %c2_i32 : i32 to vector<64x1xi32>
    %23 = arith.andi %11, %22 : vector<64x1xi32>
    %c0_i32_6 = arith.constant 0 : i32
    %24 = vector.broadcast %c0_i32_6 : i32 to vector<64x1xi32>
    %25 = arith.cmpi ne, %23, %24 : vector<64x1xi32>
    %26 = arith.xori %21, %25 : vector<64x1xi1>
    %cst_7 = arith.constant dense<true> : vector<64x1xi1>
    %27 = arith.xori %26, %cst_7 : vector<64x1xi1>
    %c63_i32 = arith.constant 63 : i32
    %28 = tpu.dynamic_rotate %17 by %c63_i32 dim 0 : vector<64x128xf32>, i32 -> vector<64x128xf32>
    %c1_i32_8 = arith.constant 1 : i32
    %29 = tpu.dynamic_rotate %17 by %c1_i32_8 dim 0 : vector<64x128xf32>, i32 -> vector<64x128xf32>
    %30 = vector.shape_cast %21 : vector<64x1xi1> to vector<64x1xi1>
    %31 = vector.broadcast %30 : vector<64x1xi1> to vector<64x128xi1>
    %32 = arith.select %31, %29, %28 : vector<64x128xi1>, vector<64x128xf32>
    %33 = arith.minimumf %17, %32 : vector<64x128xf32>
    %34 = arith.maximumf %17, %32 : vector<64x128xf32>
    %35 = vector.shape_cast %27 : vector<64x1xi1> to vector<64x1xi1>
    %36 = vector.broadcast %35 : vector<64x1xi1> to vector<64x128xi1>
    %37 = arith.select %36, %33, %34 : vector<64x128xi1>, vector<64x128xf32>
    %c2_i32_9 = arith.constant 2 : i32
    %38 = vector.broadcast %c2_i32_9 : i32 to vector<64x1xi32>
    %39 = arith.andi %11, %38 : vector<64x1xi32>
    %c0_i32_10 = arith.constant 0 : i32
    %40 = vector.broadcast %c0_i32_10 : i32 to vector<64x1xi32>
    %41 = arith.cmpi ne, %39, %40 : vector<64x1xi32>
    %c4_i32 = arith.constant 4 : i32
    %42 = vector.broadcast %c4_i32 : i32 to vector<64x1xi32>
    %43 = arith.andi %11, %42 : vector<64x1xi32>
    %c0_i32_11 = arith.constant 0 : i32
    %44 = vector.broadcast %c0_i32_11 : i32 to vector<64x1xi32>
    %45 = arith.cmpi ne, %43, %44 : vector<64x1xi32>
    %46 = arith.xori %41, %45 : vector<64x1xi1>
    %cst_12 = arith.constant dense<true> : vector<64x1xi1>
    %47 = arith.xori %46, %cst_12 : vector<64x1xi1>
    %c62_i32 = arith.constant 62 : i32
    %48 = tpu.dynamic_rotate %37 by %c62_i32 dim 0 : vector<64x128xf32>, i32 -> vector<64x128xf32>
    %c2_i32_13 = arith.constant 2 : i32
    %49 = tpu.dynamic_rotate %37 by %c2_i32_13 dim 0 : vector<64x128xf32>, i32 -> vector<64x128xf32>
    %50 = vector.shape_cast %41 : vector<64x1xi1> to vector<64x1xi1>
    %51 = vector.broadcast %50 : vector<64x1xi1> to vector<64x128xi1>
    %52 = arith.select %51, %49, %48 : vector<64x128xi1>, vector<64x128xf32>
    %53 = arith.minimumf %37, %52 : vector<64x128xf32>
    %54 = arith.maximumf %37, %52 : vector<64x128xf32>
    %55 = vector.shape_cast %47 : vector<64x1xi1> to vector<64x1xi1>
    %56 = vector.broadcast %55 : vector<64x1xi1> to vector<64x128xi1>
    %57 = arith.select %56, %53, %54 : vector<64x128xi1>, vector<64x128xf32>
    %c1_i32_14 = arith.constant 1 : i32
    %58 = vector.broadcast %c1_i32_14 : i32 to vector<64x1xi32>
    %59 = arith.andi %11, %58 : vector<64x1xi32>
    %c0_i32_15 = arith.constant 0 : i32
    %60 = vector.broadcast %c0_i32_15 : i32 to vector<64x1xi32>
    %61 = arith.cmpi ne, %59, %60 : vector<64x1xi32>
    %c4_i32_16 = arith.constant 4 : i32
    %62 = vector.broadcast %c4_i32_16 : i32 to vector<64x1xi32>
    %63 = arith.andi %11, %62 : vector<64x1xi32>
    %c0_i32_17 = arith.constant 0 : i32
    %64 = vector.broadcast %c0_i32_17 : i32 to vector<64x1xi32>
    %65 = arith.cmpi ne, %63, %64 : vector<64x1xi32>
    %66 = arith.xori %61, %65 : vector<64x1xi1>
    %cst_18 = arith.constant dense<true> : vector<64x1xi1>
    %67 = arith.xori %66, %cst_18 : vector<64x1xi1>
    %c63_i32_19 = arith.constant 63 : i32
    %68 = tpu.dynamic_rotate %57 by %c63_i32_19 dim 0 : vector<64x128xf32>, i32 -> vector<64x128xf32>
    %c1_i32_20 = arith.constant 1 : i32
    %69 = tpu.dynamic_rotate %57 by %c1_i32_20 dim 0 : vector<64x128xf32>, i32 -> vector<64x128xf32>
    %70 = vector.shape_cast %61 : vector<64x1xi1> to vector<64x1xi1>
    %71 = vector.broadcast %70 : vector<64x1xi1> to vector<64x128xi1>
    %72 = arith.select %71, %69, %68 : vector<64x128xi1>, vector<64x128xf32>
    %73 = arith.minimumf %57, %72 : vector<64x128xf32>
    %74 = arith.maximumf %57, %72 : vector<64x128xf32>
    %75 = vector.shape_cast %67 : vector<64x1xi1> to vector<64x1xi1>
    %76 = vector.broadcast %75 : vector<64x1xi1> to vector<64x128xi1>
    %77 = arith.select %76, %73, %74 : vector<64x128xi1>, vector<64x128xf32>
    %c4_i32_21 = arith.constant 4 : i32
    %78 = vector.broadcast %c4_i32_21 : i32 to vector<64x1xi32>
    %79 = arith.andi %11, %78 : vector<64x1xi32>
    %c0_i32_22 = arith.constant 0 : i32
    %80 = vector.broadcast %c0_i32_22 : i32 to vector<64x1xi32>
    %81 = arith.cmpi ne, %79, %80 : vector<64x1xi32>
    %c8_i32 = arith.constant 8 : i32
    %82 = vector.broadcast %c8_i32 : i32 to vector<64x1xi32>
    %83 = arith.andi %11, %82 : vector<64x1xi32>
    %c0_i32_23 = arith.constant 0 : i32
    %84 = vector.broadcast %c0_i32_23 : i32 to vector<64x1xi32>
    %85 = arith.cmpi ne, %83, %84 : vector<64x1xi32>
    %86 = arith.xori %81, %85 : vector<64x1xi1>
    %cst_24 = arith.constant dense<true> : vector<64x1xi1>
    %87 = arith.xori %86, %cst_24 : vector<64x1xi1>
    %c60_i32 = arith.constant 60 : i32
    %88 = tpu.dynamic_rotate %77 by %c60_i32 dim 0 : vector<64x128xf32>, i32 -> vector<64x128xf32>
    %c4_i32_25 = arith.constant 4 : i32
    %89 = tpu.dynamic_rotate %77 by %c4_i32_25 dim 0 : vector<64x128xf32>, i32 -> vector<64x128xf32>
    %90 = vector.shape_cast %81 : vector<64x1xi1> to vector<64x1xi1>
    %91 = vector.broadcast %90 : vector<64x1xi1> to vector<64x128xi1>
    %92 = arith.select %91, %89, %88 : vector<64x128xi1>, vector<64x128xf32>
    %93 = arith.minimumf %77, %92 : vector<64x128xf32>
    %94 = arith.maximumf %77, %92 : vector<64x128xf32>
    %95 = vector.shape_cast %87 : vector<64x1xi1> to vector<64x1xi1>
    %96 = vector.broadcast %95 : vector<64x1xi1> to vector<64x128xi1>
    %97 = arith.select %96, %93, %94 : vector<64x128xi1>, vector<64x128xf32>
    %c2_i32_26 = arith.constant 2 : i32
    %98 = vector.broadcast %c2_i32_26 : i32 to vector<64x1xi32>
    %99 = arith.andi %11, %98 : vector<64x1xi32>
    %c0_i32_27 = arith.constant 0 : i32
    %100 = vector.broadcast %c0_i32_27 : i32 to vector<64x1xi32>
    %101 = arith.cmpi ne, %99, %100 : vector<64x1xi32>
    %c8_i32_28 = arith.constant 8 : i32
    %102 = vector.broadcast %c8_i32_28 : i32 to vector<64x1xi32>
    %103 = arith.andi %11, %102 : vector<64x1xi32>
    %c0_i32_29 = arith.constant 0 : i32
    %104 = vector.broadcast %c0_i32_29 : i32 to vector<64x1xi32>
    %105 = arith.cmpi ne, %103, %104 : vector<64x1xi32>
    %106 = arith.xori %101, %105 : vector<64x1xi1>
    %cst_30 = arith.constant dense<true> : vector<64x1xi1>
    %107 = arith.xori %106, %cst_30 : vector<64x1xi1>
    %c62_i32_31 = arith.constant 62 : i32
    %108 = tpu.dynamic_rotate %97 by %c62_i32_31 dim 0 : vector<64x128xf32>, i32 -> vector<64x128xf32>
    %c2_i32_32 = arith.constant 2 : i32
    %109 = tpu.dynamic_rotate %97 by %c2_i32_32 dim 0 : vector<64x128xf32>, i32 -> vector<64x128xf32>
    %110 = vector.shape_cast %101 : vector<64x1xi1> to vector<64x1xi1>
    %111 = vector.broadcast %110 : vector<64x1xi1> to vector<64x128xi1>
    %112 = arith.select %111, %109, %108 : vector<64x128xi1>, vector<64x128xf32>
    %113 = arith.minimumf %97, %112 : vector<64x128xf32>
    %114 = arith.maximumf %97, %112 : vector<64x128xf32>
    %115 = vector.shape_cast %107 : vector<64x1xi1> to vector<64x1xi1>
    %116 = vector.broadcast %115 : vector<64x1xi1> to vector<64x128xi1>
    %117 = arith.select %116, %113, %114 : vector<64x128xi1>, vector<64x128xf32>
    %c1_i32_33 = arith.constant 1 : i32
    %118 = vector.broadcast %c1_i32_33 : i32 to vector<64x1xi32>
    %119 = arith.andi %11, %118 : vector<64x1xi32>
    %c0_i32_34 = arith.constant 0 : i32
    %120 = vector.broadcast %c0_i32_34 : i32 to vector<64x1xi32>
    %121 = arith.cmpi ne, %119, %120 : vector<64x1xi32>
    %c8_i32_35 = arith.constant 8 : i32
    %122 = vector.broadcast %c8_i32_35 : i32 to vector<64x1xi32>
    %123 = arith.andi %11, %122 : vector<64x1xi32>
    %c0_i32_36 = arith.constant 0 : i32
    %124 = vector.broadcast %c0_i32_36 : i32 to vector<64x1xi32>
    %125 = arith.cmpi ne, %123, %124 : vector<64x1xi32>
    %126 = arith.xori %121, %125 : vector<64x1xi1>
    %cst_37 = arith.constant dense<true> : vector<64x1xi1>
    %127 = arith.xori %126, %cst_37 : vector<64x1xi1>
    %c63_i32_38 = arith.constant 63 : i32
    %128 = tpu.dynamic_rotate %117 by %c63_i32_38 dim 0 : vector<64x128xf32>, i32 -> vector<64x128xf32>
    %c1_i32_39 = arith.constant 1 : i32
    %129 = tpu.dynamic_rotate %117 by %c1_i32_39 dim 0 : vector<64x128xf32>, i32 -> vector<64x128xf32>
    %130 = vector.shape_cast %121 : vector<64x1xi1> to vector<64x1xi1>
    %131 = vector.broadcast %130 : vector<64x1xi1> to vector<64x128xi1>
    %132 = arith.select %131, %129, %128 : vector<64x128xi1>, vector<64x128xf32>
    %133 = arith.minimumf %117, %132 : vector<64x128xf32>
    %134 = arith.maximumf %117, %132 : vector<64x128xf32>
    %135 = vector.shape_cast %127 : vector<64x1xi1> to vector<64x1xi1>
    %136 = vector.broadcast %135 : vector<64x1xi1> to vector<64x128xi1>
    %137 = arith.select %136, %133, %134 : vector<64x128xi1>, vector<64x128xf32>
    %c8_i32_40 = arith.constant 8 : i32
    %138 = vector.broadcast %c8_i32_40 : i32 to vector<64x1xi32>
    %139 = arith.andi %11, %138 : vector<64x1xi32>
    %c0_i32_41 = arith.constant 0 : i32
    %140 = vector.broadcast %c0_i32_41 : i32 to vector<64x1xi32>
    %141 = arith.cmpi ne, %139, %140 : vector<64x1xi32>
    %c16_i32 = arith.constant 16 : i32
    %142 = vector.broadcast %c16_i32 : i32 to vector<64x1xi32>
    %143 = arith.andi %11, %142 : vector<64x1xi32>
    %c0_i32_42 = arith.constant 0 : i32
    %144 = vector.broadcast %c0_i32_42 : i32 to vector<64x1xi32>
    %145 = arith.cmpi ne, %143, %144 : vector<64x1xi32>
    %146 = arith.xori %141, %145 : vector<64x1xi1>
    %cst_43 = arith.constant dense<true> : vector<64x1xi1>
    %147 = arith.xori %146, %cst_43 : vector<64x1xi1>
    %c56_i32 = arith.constant 56 : i32
    %148 = tpu.dynamic_rotate %137 by %c56_i32 dim 0 : vector<64x128xf32>, i32 -> vector<64x128xf32>
    %c8_i32_44 = arith.constant 8 : i32
    %149 = tpu.dynamic_rotate %137 by %c8_i32_44 dim 0 : vector<64x128xf32>, i32 -> vector<64x128xf32>
    %150 = vector.shape_cast %141 : vector<64x1xi1> to vector<64x1xi1>
    %151 = vector.broadcast %150 : vector<64x1xi1> to vector<64x128xi1>
    %152 = arith.select %151, %149, %148 : vector<64x128xi1>, vector<64x128xf32>
    %153 = arith.minimumf %137, %152 : vector<64x128xf32>
    %154 = arith.maximumf %137, %152 : vector<64x128xf32>
    %155 = vector.shape_cast %147 : vector<64x1xi1> to vector<64x1xi1>
    %156 = vector.broadcast %155 : vector<64x1xi1> to vector<64x128xi1>
    %157 = arith.select %156, %153, %154 : vector<64x128xi1>, vector<64x128xf32>
    %c4_i32_45 = arith.constant 4 : i32
    %158 = vector.broadcast %c4_i32_45 : i32 to vector<64x1xi32>
    %159 = arith.andi %11, %158 : vector<64x1xi32>
    %c0_i32_46 = arith.constant 0 : i32
    %160 = vector.broadcast %c0_i32_46 : i32 to vector<64x1xi32>
    %161 = arith.cmpi ne, %159, %160 : vector<64x1xi32>
    %c16_i32_47 = arith.constant 16 : i32
    %162 = vector.broadcast %c16_i32_47 : i32 to vector<64x1xi32>
    %163 = arith.andi %11, %162 : vector<64x1xi32>
    %c0_i32_48 = arith.constant 0 : i32
    %164 = vector.broadcast %c0_i32_48 : i32 to vector<64x1xi32>
    %165 = arith.cmpi ne, %163, %164 : vector<64x1xi32>
    %166 = arith.xori %161, %165 : vector<64x1xi1>
    %cst_49 = arith.constant dense<true> : vector<64x1xi1>
    %167 = arith.xori %166, %cst_49 : vector<64x1xi1>
    %c60_i32_50 = arith.constant 60 : i32
    %168 = tpu.dynamic_rotate %157 by %c60_i32_50 dim 0 : vector<64x128xf32>, i32 -> vector<64x128xf32>
    %c4_i32_51 = arith.constant 4 : i32
    %169 = tpu.dynamic_rotate %157 by %c4_i32_51 dim 0 : vector<64x128xf32>, i32 -> vector<64x128xf32>
    %170 = vector.shape_cast %161 : vector<64x1xi1> to vector<64x1xi1>
    %171 = vector.broadcast %170 : vector<64x1xi1> to vector<64x128xi1>
    %172 = arith.select %171, %169, %168 : vector<64x128xi1>, vector<64x128xf32>
    %173 = arith.minimumf %157, %172 : vector<64x128xf32>
    %174 = arith.maximumf %157, %172 : vector<64x128xf32>
    %175 = vector.shape_cast %167 : vector<64x1xi1> to vector<64x1xi1>
    %176 = vector.broadcast %175 : vector<64x1xi1> to vector<64x128xi1>
    %177 = arith.select %176, %173, %174 : vector<64x128xi1>, vector<64x128xf32>
    %c2_i32_52 = arith.constant 2 : i32
    %178 = vector.broadcast %c2_i32_52 : i32 to vector<64x1xi32>
    %179 = arith.andi %11, %178 : vector<64x1xi32>
    %c0_i32_53 = arith.constant 0 : i32
    %180 = vector.broadcast %c0_i32_53 : i32 to vector<64x1xi32>
    %181 = arith.cmpi ne, %179, %180 : vector<64x1xi32>
    %c16_i32_54 = arith.constant 16 : i32
    %182 = vector.broadcast %c16_i32_54 : i32 to vector<64x1xi32>
    %183 = arith.andi %11, %182 : vector<64x1xi32>
    %c0_i32_55 = arith.constant 0 : i32
    %184 = vector.broadcast %c0_i32_55 : i32 to vector<64x1xi32>
    %185 = arith.cmpi ne, %183, %184 : vector<64x1xi32>
    %186 = arith.xori %181, %185 : vector<64x1xi1>
    %cst_56 = arith.constant dense<true> : vector<64x1xi1>
    %187 = arith.xori %186, %cst_56 : vector<64x1xi1>
    %c62_i32_57 = arith.constant 62 : i32
    %188 = tpu.dynamic_rotate %177 by %c62_i32_57 dim 0 : vector<64x128xf32>, i32 -> vector<64x128xf32>
    %c2_i32_58 = arith.constant 2 : i32
    %189 = tpu.dynamic_rotate %177 by %c2_i32_58 dim 0 : vector<64x128xf32>, i32 -> vector<64x128xf32>
    %190 = vector.shape_cast %181 : vector<64x1xi1> to vector<64x1xi1>
    %191 = vector.broadcast %190 : vector<64x1xi1> to vector<64x128xi1>
    %192 = arith.select %191, %189, %188 : vector<64x128xi1>, vector<64x128xf32>
    %193 = arith.minimumf %177, %192 : vector<64x128xf32>
    %194 = arith.maximumf %177, %192 : vector<64x128xf32>
    %195 = vector.shape_cast %187 : vector<64x1xi1> to vector<64x1xi1>
    %196 = vector.broadcast %195 : vector<64x1xi1> to vector<64x128xi1>
    %197 = arith.select %196, %193, %194 : vector<64x128xi1>, vector<64x128xf32>
    %c1_i32_59 = arith.constant 1 : i32
    %198 = vector.broadcast %c1_i32_59 : i32 to vector<64x1xi32>
    %199 = arith.andi %11, %198 : vector<64x1xi32>
    %c0_i32_60 = arith.constant 0 : i32
    %200 = vector.broadcast %c0_i32_60 : i32 to vector<64x1xi32>
    %201 = arith.cmpi ne, %199, %200 : vector<64x1xi32>
    %c16_i32_61 = arith.constant 16 : i32
    %202 = vector.broadcast %c16_i32_61 : i32 to vector<64x1xi32>
    %203 = arith.andi %11, %202 : vector<64x1xi32>
    %c0_i32_62 = arith.constant 0 : i32
    %204 = vector.broadcast %c0_i32_62 : i32 to vector<64x1xi32>
    %205 = arith.cmpi ne, %203, %204 : vector<64x1xi32>
    %206 = arith.xori %201, %205 : vector<64x1xi1>
    %cst_63 = arith.constant dense<true> : vector<64x1xi1>
    %207 = arith.xori %206, %cst_63 : vector<64x1xi1>
    %c63_i32_64 = arith.constant 63 : i32
    %208 = tpu.dynamic_rotate %197 by %c63_i32_64 dim 0 : vector<64x128xf32>, i32 -> vector<64x128xf32>
    %c1_i32_65 = arith.constant 1 : i32
    %209 = tpu.dynamic_rotate %197 by %c1_i32_65 dim 0 : vector<64x128xf32>, i32 -> vector<64x128xf32>
    %210 = vector.shape_cast %201 : vector<64x1xi1> to vector<64x1xi1>
    %211 = vector.broadcast %210 : vector<64x1xi1> to vector<64x128xi1>
    %212 = arith.select %211, %209, %208 : vector<64x128xi1>, vector<64x128xf32>
    %213 = arith.minimumf %197, %212 : vector<64x128xf32>
    %214 = arith.maximumf %197, %212 : vector<64x128xf32>
    %215 = vector.shape_cast %207 : vector<64x1xi1> to vector<64x1xi1>
    %216 = vector.broadcast %215 : vector<64x1xi1> to vector<64x128xi1>
    %217 = arith.select %216, %213, %214 : vector<64x128xi1>, vector<64x128xf32>
    %c7_i32 = arith.constant 7 : i32
    %218 = vector.broadcast %c7_i32 : i32 to vector<64x1xi32>
    %219 = arith.cmpi eq, %11, %218 : vector<64x1xi32>
    %220 = arith.extui %219 : vector<64x1xi1> to vector<64x1xi32>
    %221 = arith.sitofp %220 : vector<64x1xi32> to vector<64x1xf32>
    %222 = vector.broadcast %221 : vector<64x1xf32> to vector<64x128xf32>
    %223 = arith.mulf %217, %222 : vector<64x128xf32>
    %224 = vector.shape_cast %223 : vector<64x128xf32> to vector<2x2x16x128xf32>
    %cst_66 = arith.constant dense<0.000000e+00> : vector<2x2x128xf32>
    %225 = vector.multi_reduction <add>, %224, %cst_66 [2] : vector<2x2x16x128xf32> to vector<2x2x128xf32>
    %226 = vector.extract_strided_slice %225 {offsets = [0, 0, 0], sizes = [1, 2, 128], strides = [1, 1, 1]} : vector<2x2x128xf32> to vector<1x2x128xf32>
    %227 = vector.shape_cast %226 : vector<1x2x128xf32> to vector<2x128xf32>
    %228 = vector.extract_strided_slice %225 {offsets = [1, 0, 0], sizes = [1, 2, 128], strides = [1, 1, 1]} : vector<2x2x128xf32> to vector<1x2x128xf32>
    %229 = vector.shape_cast %228 : vector<1x2x128xf32> to vector<2x128xf32>
    %c0_67 = arith.constant 0 : index
    %c0_68 = arith.constant 0 : index
    %230 = vector.load %arg4[%c0_67, %c0_68] : memref<1x128xf32, #tpu.memory_space<vmem>>, vector<1x128xf32>
    %cst_69 = arith.constant 0.000000e+00 : f32
    %231 = vector.broadcast %cst_69 : f32 to vector<2x128xf32>
    %232 = arith.cmpf ogt, %229, %231 : vector<2x128xf32>
    %cst_70 = arith.constant 1.000000e+00 : f32
    %233 = vector.broadcast %cst_70 : f32 to vector<2x128xf32>
    %234 = arith.select %232, %229, %233 : vector<2x128xi1>, vector<2x128xf32>
    %235 = vector.broadcast %230 : vector<1x128xf32> to vector<2x128xf32>
    %236 = arith.mulf %235, %227 : vector<2x128xf32>
    %237 = tpu.reciprocal %234 {approx = true} : vector<2x128xf32> -> vector<2x128xf32>
    %238 = arith.mulf %236, %237 : vector<2x128xf32>
    %c0_71 = arith.constant 0 : index
    %c0_72 = arith.constant 0 : index
    %c0_73 = arith.constant 0 : index
    %239 = vector.load %arg5[%c0_71, %c0_72, %c0_73] : memref<1x2x128xf32, #tpu.memory_space<vmem>>, vector<1x2x128xf32>
    %240 = vector.shape_cast %239 : vector<1x2x128xf32> to vector<2x128xf32>
    %241 = vector.shape_cast %238 : vector<2x128xf32> to vector<1x2x128xf32>
    tpu.vector_store %arg5[%c0_71, %c0_72, %c0_73], %241 {strides = array<i32>} : memref<1x2x128xf32, #tpu.memory_space<vmem>>, vector<1x2x128xf32>,
    return
  }
  func.func @transform_0(%arg0: i32, %arg1: i32) -> (i32, i32, i32) {
    %c0_i32 = arith.constant 0 : i32
    %c0_i32_0 = arith.constant 0 : i32
    %c0_i32_1 = arith.constant 0 : i32
    return %arg1, %c0_i32, %c0_i32_0 : i32, i32, i32
  }
  func.func @transform_1(%arg0: i32, %arg1: i32) -> (i32, i32) {
    %c0_i32 = arith.constant 0 : i32
    %c0_i32_0 = arith.constant 0 : i32
    return %c0_i32, %arg0 : i32, i32
  }
  func.func @transform_2(%arg0: i32, %arg1: i32) -> (i32, i32) {
    %c0_i32 = arith.constant 0 : i32
    %c0_i32_0 = arith.constant 0 : i32
    return %c0_i32, %arg0 : i32, i32
  }
  func.func @transform_3(%arg0: i32, %arg1: i32) -> (i32, i32, i32) {
    %c0_i32 = arith.constant 0 : i32
    %c0_i32_0 = arith.constant 0 : i32
    return %arg1, %c0_i32, %arg0 : i32, i32, i32
  }
}

</mosaic_0001>

<llo_original>
// kernel: tpu_custom_call.1
$region0: #{tpu_custom_call.1}
  #allocation0 [shape = 'u32[]', space=smem, size = 0x4, offset = 0x4, fixed_abs, tag = 'smem constant byte address 0x4 - core index']
  #allocation1 [shape = 'u32[144,128]{1,0:T(1,128)}', space=vmem, size = 0x12000, scoped, tag = 'internal scratch']
  %s0 = inlined_call_operand.hbm [shape: bf16[1,64,64], index: 0, kind: input, shape index: {}]
  %s1 = inlined_call_operand.hbm [shape: bf16[64,256], index: 1, kind: input, shape index: {}]
  %s2 = inlined_call_operand.vmem [shape: f32[1,128], index: 2, kind: input, shape index: {}]
  %s3 = inlined_call_operand.hbm [shape: f32[1,2,128], index: 3, kind: output, shape index: {}]
  %s4 = sld [smem:[#allocation0]]
  $region30: #{tpu_custom_call.1} parent=0
    _
  %s6 = ssub.s32 1, %s4
  %s7 = scalar_select 0, %s6, %s4
  $region1: #{tpu_custom_call.1} parent=0
    #allocation2 [shape = 'u8[16384]{0}', space=vmem, size = 0x4000, scoped, tag = 'input window, operand 0, single buffered']
    #allocation3 [shape = 's32[1]{0}', space=sflag, size = 0x4, scoped, tag = 'scoped memory for tpu_custom_call.1']
    #allocation4 [shape = 's32[1]{0}', space=sflag, size = 0x4, scoped, tag = 'scoped memory for tpu_custom_call.1']
    #allocation5 [shape = 'u8[32768]{0}', space=vmem, size = 0x8000, scoped, tag = 'input window, operand 1, single buffered']
    #allocation6 [shape = 's32[1]{0}', space=sflag, size = 0x4, scoped, tag = 'scoped memory for tpu_custom_call.1']
    #allocation7 [shape = 'u8[1024]{0}', space=vmem, size = 0x400, scoped, tag = 'output window, operand 0, single buffered']
    %8 = vsyncpa [#allocation3], 0
    %9 = vsyncpa [#allocation6], 0
    %10 = vsyncpa [#allocation4], 0
    // Predicated region
    $region2: #{tpu_custom_call.1} parent=1 // pred_check
      _
    $region3: #{tpu_custom_call.1} parent=1 // pred_check_branch
      %12 = sbr.rel (0) target = $region5
    $region4: #{tpu_custom_call.1} parent=1 // pred_region
      %s14 = ssub.s32 512, 512
      %15 = vsyncadd [#allocation3], %s14
      %s16 = sshll.u32 [#allocation2], 4
      %s17 = int_to_ptr.vmem [resolvable:$true] %s16
      %22 = dma.hbm_to_vmem [thread:$0]  %s0, 512, %s17, [#allocation3], 64, 64, 4
    $region5: #{tpu_custom_call.1} parent=1 // pred_fallthru
      _
    // Predicated region
    $region6: #{tpu_custom_call.1} parent=1 // pred_check
      _
    $region7: #{tpu_custom_call.1} parent=1 // pred_check_branch
      %24 = sbr.rel (0) target = $region9
    $region8: #{tpu_custom_call.1} parent=1 // pred_region
      %s26 = ssub.s32 1024, 1024
      %27 = vsyncadd [#allocation6], %s26
      %s28 = sshll.u32 [#allocation5], 4
      %s29 = int_to_ptr.vmem [resolvable:$true] %s28
      %34 = dma.hbm_to_vmem [thread:$0]  %s1, 1024, %s29, [#allocation6], 128, 128, 8
    $region9: #{tpu_custom_call.1} parent=1 // pred_fallthru
      _
    // Predicated region
    $region10: #{tpu_custom_call.1} parent=1 // pred_check
      _
    $region11: #{tpu_custom_call.1} parent=1 // pred_check_branch
      %36 = sbr.rel (0) target = $region13
    $region12: #{tpu_custom_call.1} parent=1 // pred_region
      _
    $region13: #{tpu_custom_call.1} parent=1 // pred_fallthru
      _
    // Predicated region
    $region14: #{tpu_custom_call.1} parent=1 // pred_check
      _
    $region15: #{tpu_custom_call.1} parent=1 // pred_check_branch
      %38 = sbr.rel (0) target = $region17
    $region16: #{tpu_custom_call.1} parent=1 // pred_region
      %39 = dma.done [#allocation3], 512
    $region17: #{tpu_custom_call.1} parent=1 // pred_fallthru
      _
    // Predicated region
    $region18: #{tpu_custom_call.1} parent=1 // pred_check
      _
    $region19: #{tpu_custom_call.1} parent=1 // pred_check_branch
      %41 = sbr.rel (0) target = $region21
    $region20: #{tpu_custom_call.1} parent=1 // pred_region
      %42 = dma.done [#allocation6], 1024
    $region21: #{tpu_custom_call.1} parent=1 // pred_fallthru
      _
    %v44 = vld [vmem:[#allocation2] sm:$0xf]
    %v45 = vld [vmem:[#allocation2 + $0x4] sm:$0xf]
    %v46 = vld [vmem:[#allocation2 + $0x8] sm:$0xf]
    %v47 = vld [vmem:[#allocation2 + $0xc] sm:$0xf]
    %v48 = vld [vmem:[#allocation2 + $0x10] sm:$0xf]
    %v49 = vld [vmem:[#allocation2 + $0x14] sm:$0xf]
    %v50 = vld [vmem:[#allocation2 + $0x18] sm:$0xf]
    %v51 = vld [vmem:[#allocation2 + $0x1c] sm:$0xf]
    %v52 = vld [vmem:[#allocation5] sm:$0xff]
    %v53 = vld [vmem:[#allocation5 + $0x8] sm:$0xff]
    %v54 = vld [vmem:[#allocation5 + $0x10] sm:$0xff]
    %v55 = vld [vmem:[#allocation5 + $0x18] sm:$0xff]
    %v56 = vld [vmem:[#allocation5 + $0x20] sm:$0xff]
    %v57 = vld [vmem:[#allocation5 + $0x28] sm:$0xff]
    %v58 = vld [vmem:[#allocation5 + $0x30] sm:$0xff]
    %v59 = vld [vmem:[#allocation5 + $0x38] sm:$0xff]
    %v68 = vunpack.c.l.b16 %v44
    %v69 = vunpack.c.l.b16 %v45
    %v70 = vunpack.c.l.b16 %v46
    %v71 = vunpack.c.l.b16 %v47
    %v72 = vunpack.c.l.b16 %v48
    %v73 = vunpack.c.l.b16 %v49
    %v74 = vunpack.c.l.b16 %v50
    %v75 = vunpack.c.l.b16 %v51
    %v76 = vpack.c.b16 %v69, %v68
    %v77 = vpack.c.b16 %v71, %v70
    %v78 = vpack.c.b16 %v73, %v72
    %v79 = vpack.c.b16 %v75, %v74
    %v88 = vunpack.c.l.b16 %v52
    %v89 = vunpack.c.h.b16 %v52
    %v90 = vunpack.c.l.b16 %v53
    %v91 = vunpack.c.h.b16 %v53
    %v92 = vunpack.c.l.b16 %v54
    %v93 = vunpack.c.h.b16 %v54
    %v94 = vunpack.c.l.b16 %v55
    %v95 = vunpack.c.h.b16 %v55
    %v96 = vunpack.c.l.b16 %v56
    %v97 = vunpack.c.h.b16 %v56
    %v98 = vunpack.c.l.b16 %v57
    %v99 = vunpack.c.h.b16 %v57
    %v100 = vunpack.c.l.b16 %v58
    %v101 = vunpack.c.h.b16 %v58
    %v102 = vunpack.c.l.b16 %v59
    %v103 = vunpack.c.h.b16 %v59
    %v104 = vpack.c.b16 %v90, %v88
    %v105 = vpack.c.b16 %v91, %v89
    %v106 = vpack.c.b16 %v94, %v92
    %v107 = vpack.c.b16 %v95, %v93
    %v108 = vpack.c.b16 %v98, %v96
    %v109 = vpack.c.b16 %v99, %v97
    %v110 = vpack.c.b16 %v102, %v100
    %v111 = vpack.c.b16 %v103, %v101
    %vm120 = vcmask 523264
    %v122 = vsel %vm120, %v76, 0
    %v125 = vsel %vm120, %v77, 0
    %v128 = vsel %vm120, %v78, 0
    %v131 = vsel %vm120, %v79, 0
    %133 = vmatprep.subr.bf16.mxu0 %v105
    %134 = vmatpush1.bf16.msra.mxu0 %v104
    %135 = vmatprep.subr.bf16.mxu0 %v107
    %136 = vmatpush1.bf16.msra.mxu0 %v106
    %137 = vmatprep.subr.bf16.mxu0 %v109
    %138 = vmatpush1.bf16.msra.mxu0 %v108
    %139 = vmatprep.subr.bf16.mxu0 %v111
    %140 = vmatpush1.bf16.msra.mxu0 %v110
    %141 = vmatprep.subr.bf16.mxu0 0
    %142 = vmatpush1.bf16.msra.mxu0 0
    %143 = vmatprep.subr.bf16.mxu0 0
    %144 = vmatpush1.bf16.msra.mxu0 0
    %145 = vmatprep.subr.bf16.mxu0 0
    %146 = vmatpush1.bf16.msra.mxu0 0
    %147 = vmatprep.subr.bf16.mxu0 0
    %148 = vmatpush1.bf16.msra.mxu0 0
    %149 = vmatprep.subr.bf16.mxu0 0
    %150 = vmatpush1.bf16.msra.mxu0 0
    %151 = vmatprep.subr.bf16.mxu0 0
    %152 = vmatpush1.bf16.msra.mxu0 0
    %153 = vmatprep.subr.bf16.mxu0 0
    %154 = vmatpush1.bf16.msra.mxu0 0
    %155 = vmatprep.subr.bf16.mxu0 0
    %156 = vmatpush1.bf16.msra.mxu0 0
    %157 = vmatprep.subr.bf16.mxu0 0
    %158 = vmatpush1.bf16.msra.mxu0 0
    %159 = vmatprep.subr.bf16.mxu0 0
    %160 = vmatpush1.bf16.msra.mxu0 0
    %161 = vmatprep.subr.bf16.mxu0 0
    %162 = vmatpush1.bf16.msra.mxu0 0
    %163 = vmatprep.subr.bf16.mxu0 0
    %164 = vmatpush1.bf16.msra.mxu0 0
    %165 = vmatprep.mubr.bf16.mxu0 0
    %166 = vmatmul.mubr.bf16.gmra.mrb[0].mxu0 %v122
    %v167 = vpop.f32.mrb[0].mxu0
    %v168 = vadd.f32 0.0, %v167
    %v169 = vpop.f32.mrb[0].mxu0
    %v170 = vadd.f32 0.0, %v169
    %v171 = vpop.f32.mrb[0].mxu0
    %v172 = vadd.f32 0.0, %v171
    %v173 = vpop.f32.mrb[0].mxu0
    %v174 = vadd.f32 0.0, %v173
    %175 = vmatprep.mubr.bf16.mxu0 0
    %176 = vmatmul.mubr.bf16.gmra.mrb[0].mxu0 %v125
    %v177 = vpop.f32.mrb[0].mxu0
    %v178 = vadd.f32 0.0, %v177
    %v179 = vpop.f32.mrb[0].mxu0
    %v180 = vadd.f32 0.0, %v179
    %v181 = vpop.f32.mrb[0].mxu0
    %v182 = vadd.f32 0.0, %v181
    %v183 = vpop.f32.mrb[0].mxu0
    %v184 = vadd.f32 0.0, %v183
    %185 = vmatprep.mubr.bf16.mxu0 0
    %186 = vmatmul.mubr.bf16.gmra.mrb[0].mxu0 %v128
    %v187 = vpop.f32.mrb[0].mxu0
    %v188 = vadd.f32 0.0, %v187
    %v189 = vpop.f32.mrb[0].mxu0
    %v190 = vadd.f32 0.0, %v189
    %v191 = vpop.f32.mrb[0].mxu0
    %v192 = vadd.f32 0.0, %v191
    %v193 = vpop.f32.mrb[0].mxu0
    %v194 = vadd.f32 0.0, %v193
    %195 = vmatprep.mubr.bf16.mxu0 0
    %196 = vmatmul.mubr.bf16.gmra.mrb[0].mxu0 %v131
    %v197 = vpop.f32.mrb[0].mxu0
    %v198 = vadd.f32 0.0, %v197
    %v199 = vpop.f32.mrb[0].mxu0
    %v200 = vadd.f32 0.0, %v199
    %v201 = vpop.f32.mrb[0].mxu0
    %v202 = vadd.f32 0.0, %v201
    %v203 = vpop.f32.mrb[0].mxu0
    %v204 = vadd.f32 0.0, %v203
    %205 = vdwg.mxu0
    %v206 = vmul.f32 %v168, %v168
    %v207 = vmul.f32 %v172, %v172
    %v208 = vmul.f32 %v178, %v178
    %v209 = vmul.f32 %v182, %v182
    %v210 = vmul.f32 %v188, %v188
    %v211 = vmul.f32 %v192, %v192
    %v212 = vmul.f32 %v198, %v198
    %v213 = vmul.f32 %v202, %v202
    %v214 = vmul.f32 %v170, %v170
    %v215 = vmul.f32 %v174, %v174
    %v216 = vmul.f32 %v180, %v180
    %v217 = vmul.f32 %v184, %v184
    %v218 = vmul.f32 %v190, %v190
    %v219 = vmul.f32 %v194, %v194
    %v220 = vmul.f32 %v200, %v200
    %v221 = vmul.f32 %v204, %v204
    %v222 = vadd.f32 %v206, %v214
    %v223 = vadd.f32 %v207, %v215
    %v224 = vadd.f32 %v208, %v216
    %v225 = vadd.f32 %v209, %v217
    %v226 = vadd.f32 %v210, %v218
    %v227 = vadd.f32 %v211, %v219
    %v228 = vadd.f32 %v212, %v220
    %v229 = vadd.f32 %v213, %v221
    %v230 = vlaneseq
    %v231 = vshrl.u32 %v230, 7
    %v232 = vadd.s32 %v231, 8
    %v233 = vadd.s32 %v231, 16
    %v234 = vadd.s32 %v231, 24
    %v235 = vadd.s32 %v231, 32
    %v236 = vadd.s32 %v231, 40
    %v237 = vadd.s32 %v231, 48
    %v238 = vadd.s32 %v231, 56
    %v239 = vand.u32 %v231, 15
    %v240 = vand.u32 %v232, 15
    %v241 = vand.u32 %v233, 15
    %v242 = vand.u32 %v234, 15
    %v243 = vand.u32 %v235, 15
    %v244 = vand.u32 %v236, 15
    %v245 = vand.u32 %v237, 15
    %v246 = vand.u32 %v238, 15
    %vm247 = vcmp.lt.s32.totalorder %v239, 15
    %vm248 = vcmp.lt.s32.totalorder %v240, 15
    %vm249 = vcmp.lt.s32.totalorder %v241, 15
    %vm250 = vcmp.lt.s32.totalorder %v242, 15
    %vm251 = vcmp.lt.s32.totalorder %v243, 15
    %vm252 = vcmp.lt.s32.totalorder %v244, 15
    %vm253 = vcmp.lt.s32.totalorder %v245, 15
    %vm254 = vcmp.lt.s32.totalorder %v246, 15
    %v255 = vsel %vm247, 1, 0
    %v256 = vsel %vm248, 1, 0
    %v257 = vsel %vm249, 1, 0
    %v258 = vsel %vm250, 1, 0
    %v259 = vsel %vm251, 1, 0
    %v260 = vsel %vm252, 1, 0
    %v261 = vsel %vm253, 1, 0
    %v262 = vsel %vm254, 1, 0
    %vm263 = vcmp.eq.s32.totalorder %v255, 1
    %vm264 = vcmp.eq.s32.totalorder %v256, 1
    %vm265 = vcmp.eq.s32.totalorder %v257, 1
    %vm266 = vcmp.eq.s32.totalorder %v258, 1
    %vm267 = vcmp.eq.s32.totalorder %v259, 1
    %vm268 = vcmp.eq.s32.totalorder %v260, 1
    %vm269 = vcmp.eq.s32.totalorder %v261, 1
    %vm270 = vcmp.eq.s32.totalorder %v262, 1
    %v271 = vsel %vm263, %v222, 3.4028235e+38
    %v272 = vsel %vm264, %v223, 3.4028235e+38
    %v273 = vsel %vm265, %v224, 3.4028235e+38
    %v274 = vsel %vm266, %v225, 3.4028235e+38
    %v275 = vsel %vm267, %v226, 3.4028235e+38
    %v276 = vsel %vm268, %v227, 3.4028235e+38
    %v277 = vsel %vm269, %v228, 3.4028235e+38
    %v278 = vsel %vm270, %v229, 3.4028235e+38
    %v279 = vand.u32 %v239, 1
    %v280 = vand.u32 %v240, 1
    %v281 = vand.u32 %v241, 1
    %v282 = vand.u32 %v242, 1
    %v283 = vand.u32 %v243, 1
    %v284 = vand.u32 %v244, 1
    %v285 = vand.u32 %v245, 1
    %v286 = vand.u32 %v246, 1
    %vm287 = vcmp.ne.s32.totalorder %v279, 0
    %vm288 = vcmp.ne.s32.totalorder %v280, 0
    %vm289 = vcmp.ne.s32.totalorder %v281, 0
    %vm290 = vcmp.ne.s32.totalorder %v282, 0
    %vm291 = vcmp.ne.s32.totalorder %v283, 0
    %vm292 = vcmp.ne.s32.totalorder %v284, 0
    %vm293 = vcmp.ne.s32.totalorder %v285, 0
    %vm294 = vcmp.ne.s32.totalorder %v286, 0
    %v295 = vand.u32 %v239, 2
    %v296 = vand.u32 %v240, 2
    %v297 = vand.u32 %v241, 2
    %v298 = vand.u32 %v242, 2
    %v299 = vand.u32 %v243, 2
    %v300 = vand.u32 %v244, 2
    %v301 = vand.u32 %v245, 2
    %v302 = vand.u32 %v246, 2
    %vm303 = vcmp.ne.s32.totalorder %v295, 0
    %vm304 = vcmp.ne.s32.totalorder %v296, 0
    %vm305 = vcmp.ne.s32.totalorder %v297, 0
    %vm306 = vcmp.ne.s32.totalorder %v298, 0
    %vm307 = vcmp.ne.s32.totalorder %v299, 0
    %vm308 = vcmp.ne.s32.totalorder %v300, 0
    %vm309 = vcmp.ne.s32.totalorder %v301, 0
    %vm310 = vcmp.ne.s32.totalorder %v302, 0
    %vm311 = vmxor %vm287, %vm303
    %vm312 = vmxor %vm288, %vm304
    %vm313 = vmxor %vm289, %vm305
    %vm314 = vmxor %vm290, %vm306
    %vm315 = vmxor %vm291, %vm307
    %vm316 = vmxor %vm292, %vm308
    %vm317 = vmxor %vm293, %vm309
    %vm318 = vmxor %vm294, %vm310
    %vm319 = vmxor %vm311, 1
    %vm320 = vmxor %vm312, 1
    %vm321 = vmxor %vm313, 1
    %vm322 = vmxor %vm314, 1
    %vm323 = vmxor %vm315, 1
    %vm324 = vmxor %vm316, 1
    %vm325 = vmxor %vm317, 1
    %vm326 = vmxor %vm318, 1
    %v327 = vrot.slane %v271, 1
    %v328 = vrot.slane %v272, 1
    %v329 = vrot.slane %v273, 1
    %v330 = vrot.slane %v274, 1
    %v331 = vrot.slane %v275, 1
    %v332 = vrot.slane %v276, 1
    %v333 = vrot.slane %v277, 1
    %v334 = vrot.slane %v278, 1
    %vm335 = vcmp.lt.s32.totalorder %v231, 7
    %v336 = vsel %vm335, %v333, %v334
    %v337 = vsel %vm335, %v332, %v333
    %v338 = vsel %vm335, %v331, %v332
    %v339 = vsel %vm335, %v330, %v331
    %v340 = vsel %vm335, %v329, %v330
    %v341 = vsel %vm335, %v328, %v329
    %v342 = vsel %vm335, %v327, %v328
    %v343 = vsel %vm335, %v334, %v327
    %v344 = vrot.slane %v271, 7
    %v345 = vrot.slane %v272, 7
    %v346 = vrot.slane %v273, 7
    %v347 = vrot.slane %v274, 7
    %v348 = vrot.slane %v275, 7
    %v349 = vrot.slane %v276, 7
    %v350 = vrot.slane %v277, 7
    %v351 = vrot.slane %v278, 7
    %vm352 = vcmp.lt.s32.totalorder %v231, 1
    %v353 = vsel %vm352, %v350, %v351
    %v354 = vsel %vm352, %v349, %v350
    %v355 = vsel %vm352, %v348, %v349
    %v356 = vsel %vm352, %v347, %v348
    %v357 = vsel %vm352, %v346, %v347
    %v358 = vsel %vm352, %v345, %v346
    %v359 = vsel %vm352, %v344, %v345
    %v360 = vsel %vm352, %v351, %v344
    %v361 = vsel %vm287, 1, 0
    %v362 = vsel %vm288, 1, 0
    %v363 = vsel %vm289, 1, 0
    %v364 = vsel %vm290, 1, 0
    %v365 = vsel %vm291, 1, 0
    %v366 = vsel %vm292, 1, 0
    %v367 = vsel %vm293, 1, 0
    %v368 = vsel %vm294, 1, 0
    %vm369 = vcmp.eq.s32.totalorder %v361, 1
    %vm370 = vcmp.eq.s32.totalorder %v362, 1
    %vm371 = vcmp.eq.s32.totalorder %v363, 1
    %vm372 = vcmp.eq.s32.totalorder %v364, 1
    %vm373 = vcmp.eq.s32.totalorder %v365, 1
    %vm374 = vcmp.eq.s32.totalorder %v366, 1
    %vm375 = vcmp.eq.s32.totalorder %v367, 1
    %vm376 = vcmp.eq.s32.totalorder %v368, 1
    %v377 = vsel %vm369, %v360, %v342
    %v378 = vsel %vm370, %v359, %v341
    %v379 = vsel %vm371, %v358, %v340
    %v380 = vsel %vm372, %v357, %v339
    %v381 = vsel %vm373, %v356, %v338
    %v382 = vsel %vm374, %v355, %v337
    %v383 = vsel %vm375, %v354, %v336
    %v384 = vsel %vm376, %v353, %v343
    %v385 = vmin.f32 %v271, %v377
    %v386 = vmin.f32 %v272, %v378
    %v387 = vmin.f32 %v273, %v379
    %v388 = vmin.f32 %v274, %v380
    %v389 = vmin.f32 %v275, %v381
    %v390 = vmin.f32 %v276, %v382
    %v391 = vmin.f32 %v277, %v383
    %v392 = vmin.f32 %v278, %v384
    %v393 = vmax.f32 %v271, %v377
    %v394 = vmax.f32 %v272, %v378
    %v395 = vmax.f32 %v273, %v379
    %v396 = vmax.f32 %v274, %v380
    %v397 = vmax.f32 %v275, %v381
    %v398 = vmax.f32 %v276, %v382
    %v399 = vmax.f32 %v277, %v383
    %v400 = vmax.f32 %v278, %v384
    %v401 = vsel %vm319, 1, 0
    %v402 = vsel %vm320, 1, 0
    %v403 = vsel %vm321, 1, 0
    %v404 = vsel %vm322, 1, 0
    %v405 = vsel %vm323, 1, 0
    %v406 = vsel %vm324, 1, 0
    %v407 = vsel %vm325, 1, 0
    %v408 = vsel %vm326, 1, 0
    %vm409 = vcmp.eq.s32.totalorder %v401, 1
    %vm410 = vcmp.eq.s32.totalorder %v402, 1
    %vm411 = vcmp.eq.s32.totalorder %v403, 1
    %vm412 = vcmp.eq.s32.totalorder %v404, 1
    %vm413 = vcmp.eq.s32.totalorder %v405, 1
    %vm414 = vcmp.eq.s32.totalorder %v406, 1
    %vm415 = vcmp.eq.s32.totalorder %v407, 1
    %vm416 = vcmp.eq.s32.totalorder %v408, 1
    %v417 = vsel %vm409, %v385, %v393
    %v418 = vsel %vm410, %v386, %v394
    %v419 = vsel %vm411, %v387, %v395
    %v420 = vsel %vm412, %v388, %v396
    %v421 = vsel %vm413, %v389, %v397
    %v422 = vsel %vm414, %v390, %v398
    %v423 = vsel %vm415, %v391, %v399
    %v424 = vsel %vm416, %v392, %v400
    %v425 = vand.u32 %v239, 4
    %v426 = vand.u32 %v240, 4
    %v427 = vand.u32 %v241, 4
    %v428 = vand.u32 %v242, 4
    %v429 = vand.u32 %v243, 4
    %v430 = vand.u32 %v244, 4
    %v431 = vand.u32 %v245, 4
    %v432 = vand.u32 %v246, 4
    %vm433 = vcmp.ne.s32.totalorder %v425, 0
    %vm434 = vcmp.ne.s32.totalorder %v426, 0
    %vm435 = vcmp.ne.s32.totalorder %v427, 0
    %vm436 = vcmp.ne.s32.totalorder %v428, 0
    %vm437 = vcmp.ne.s32.totalorder %v429, 0
    %vm438 = vcmp.ne.s32.totalorder %v430, 0
    %vm439 = vcmp.ne.s32.totalorder %v431, 0
    %vm440 = vcmp.ne.s32.totalorder %v432, 0
    %vm441 = vmxor %vm303, %vm433
    %vm442 = vmxor %vm304, %vm434
    %vm443 = vmxor %vm305, %vm435
    %vm444 = vmxor %vm306, %vm436
    %vm445 = vmxor %vm307, %vm437
    %vm446 = vmxor %vm308, %vm438
    %vm447 = vmxor %vm309, %vm439
    %vm448 = vmxor %vm310, %vm440
    %vm449 = vmxor %vm441, 1
    %vm450 = vmxor %vm442, 1
    %vm451 = vmxor %vm443, 1
    %vm452 = vmxor %vm444, 1
    %vm453 = vmxor %vm445, 1
    %vm454 = vmxor %vm446, 1
    %vm455 = vmxor %vm447, 1
    %vm456 = vmxor %vm448, 1
    %v457 = vrot.slane %v417, 2
    %v458 = vrot.slane %v418, 2
    %v459 = vrot.slane %v419, 2
    %v460 = vrot.slane %v420, 2
    %v461 = vrot.slane %v421, 2
    %v462 = vrot.slane %v422, 2
    %v463 = vrot.slane %v423, 2
    %v464 = vrot.slane %v424, 2
    %vm465 = vcmp.lt.s32.totalorder %v231, 6
    %v466 = vsel %vm465, %v463, %v464
    %v467 = vsel %vm465, %v462, %v463
    %v468 = vsel %vm465, %v461, %v462
    %v469 = vsel %vm465, %v460, %v461
    %v470 = vsel %vm465, %v459, %v460
    %v471 = vsel %vm465, %v458, %v459
    %v472 = vsel %vm465, %v457, %v458
    %v473 = vsel %vm465, %v464, %v457
    %v474 = vrot.slane %v417, 6
    %v475 = vrot.slane %v418, 6
    %v476 = vrot.slane %v419, 6
    %v477 = vrot.slane %v420, 6
    %v478 = vrot.slane %v421, 6
    %v479 = vrot.slane %v422, 6
    %v480 = vrot.slane %v423, 6
    %v481 = vrot.slane %v424, 6
    %vm482 = vcmp.lt.s32.totalorder %v231, 2
    %v483 = vsel %vm482, %v480, %v481
    %v484 = vsel %vm482, %v479, %v480
    %v485 = vsel %vm482, %v478, %v479
    %v486 = vsel %vm482, %v477, %v478
    %v487 = vsel %vm482, %v476, %v477
    %v488 = vsel %vm482, %v475, %v476
    %v489 = vsel %vm482, %v474, %v475
    %v490 = vsel %vm482, %v481, %v474
    %v491 = vsel %vm303, 1, 0
    %v492 = vsel %vm304, 1, 0
    %v493 = vsel %vm305, 1, 0
    %v494 = vsel %vm306, 1, 0
    %v495 = vsel %vm307, 1, 0
    %v496 = vsel %vm308, 1, 0
    %v497 = vsel %vm309, 1, 0
    %v498 = vsel %vm310, 1, 0
    %vm499 = vcmp.eq.s32.totalorder %v491, 1
    %vm500 = vcmp.eq.s32.totalorder %v492, 1
    %vm501 = vcmp.eq.s32.totalorder %v493, 1
    %vm502 = vcmp.eq.s32.totalorder %v494, 1
    %vm503 = vcmp.eq.s32.totalorder %v495, 1
    %vm504 = vcmp.eq.s32.totalorder %v496, 1
    %vm505 = vcmp.eq.s32.totalorder %v497, 1
    %vm506 = vcmp.eq.s32.totalorder %v498, 1
    %v507 = vsel %vm499, %v490, %v472
    %v508 = vsel %vm500, %v489, %v471
    %v509 = vsel %vm501, %v488, %v470
    %v510 = vsel %vm502, %v487, %v469
    %v511 = vsel %vm503, %v486, %v468
    %v512 = vsel %vm504, %v485, %v467
    %v513 = vsel %vm505, %v484, %v466
    %v514 = vsel %vm506, %v483, %v473
    %v515 = vmin.f32 %v417, %v507
    %v516 = vmin.f32 %v418, %v508
    %v517 = vmin.f32 %v419, %v509
    %v518 = vmin.f32 %v420, %v510
    %v519 = vmin.f32 %v421, %v511
    %v520 = vmin.f32 %v422, %v512
    %v521 = vmin.f32 %v423, %v513
    %v522 = vmin.f32 %v424, %v514
    %v523 = vmax.f32 %v417, %v507
    %v524 = vmax.f32 %v418, %v508
    %v525 = vmax.f32 %v419, %v509
    %v526 = vmax.f32 %v420, %v510
    %v527 = vmax.f32 %v421, %v511
    %v528 = vmax.f32 %v422, %v512
    %v529 = vmax.f32 %v423, %v513
    %v530 = vmax.f32 %v424, %v514
    %v531 = vsel %vm449, 1, 0
    %v532 = vsel %vm450, 1, 0
    %v533 = vsel %vm451, 1, 0
    %v534 = vsel %vm452, 1, 0
    %v535 = vsel %vm453, 1, 0
    %v536 = vsel %vm454, 1, 0
    %v537 = vsel %vm455, 1, 0
    %v538 = vsel %vm456, 1, 0
    %vm539 = vcmp.eq.s32.totalorder %v531, 1
    %vm540 = vcmp.eq.s32.totalorder %v532, 1
    %vm541 = vcmp.eq.s32.totalorder %v533, 1
    %vm542 = vcmp.eq.s32.totalorder %v534, 1
    %vm543 = vcmp.eq.s32.totalorder %v535, 1
    %vm544 = vcmp.eq.s32.totalorder %v536, 1
    %vm545 = vcmp.eq.s32.totalorder %v537, 1
    %vm546 = vcmp.eq.s32.totalorder %v538, 1
    %v547 = vsel %vm539, %v515, %v523
    %v548 = vsel %vm540, %v516, %v524
    %v549 = vsel %vm541, %v517, %v525
    %v550 = vsel %vm542, %v518, %v526
    %v551 = vsel %vm543, %v519, %v527
    %v552 = vsel %vm544, %v520, %v528
    %v553 = vsel %vm545, %v521, %v529
    %v554 = vsel %vm546, %v522, %v530
    %vm555 = vmxor %vm287, %vm433
    %vm556 = vmxor %vm288, %vm434
    %vm557 = vmxor %vm289, %vm435
    %vm558 = vmxor %vm290, %vm436
    %vm559 = vmxor %vm291, %vm437
    %vm560 = vmxor %vm292, %vm438
    %vm561 = vmxor %vm293, %vm439
    %vm562 = vmxor %vm294, %vm440
    %vm563 = vmxor %vm555, 1
    %vm564 = vmxor %vm556, 1
    %vm565 = vmxor %vm557, 1
    %vm566 = vmxor %vm558, 1
    %vm567 = vmxor %vm559, 1
    %vm568 = vmxor %vm560, 1
    %vm569 = vmxor %vm561, 1
    %vm570 = vmxor %vm562, 1
    %v571 = vrot.slane %v547, 1
    %v572 = vrot.slane %v548, 1
    %v573 = vrot.slane %v549, 1
    %v574 = vrot.slane %v550, 1
    %v575 = vrot.slane %v551, 1
    %v576 = vrot.slane %v552, 1
    %v577 = vrot.slane %v553, 1
    %v578 = vrot.slane %v554, 1
    %v579 = vsel %vm335, %v577, %v578
    %v580 = vsel %vm335, %v576, %v577
    %v581 = vsel %vm335, %v575, %v576
    %v582 = vsel %vm335, %v574, %v575
    %v583 = vsel %vm335, %v573, %v574
    %v584 = vsel %vm335, %v572, %v573
    %v585 = vsel %vm335, %v571, %v572
    %v586 = vsel %vm335, %v578, %v571
    %v587 = vrot.slane %v547, 7
    %v588 = vrot.slane %v548, 7
    %v589 = vrot.slane %v549, 7
    %v590 = vrot.slane %v550, 7
    %v591 = vrot.slane %v551, 7
    %v592 = vrot.slane %v552, 7
    %v593 = vrot.slane %v553, 7
    %v594 = vrot.slane %v554, 7
    %v595 = vsel %vm352, %v593, %v594
    %v596 = vsel %vm352, %v592, %v593
    %v597 = vsel %vm352, %v591, %v592
    %v598 = vsel %vm352, %v590, %v591
    %v599 = vsel %vm352, %v589, %v590
    %v600 = vsel %vm352, %v588, %v589
    %v601 = vsel %vm352, %v587, %v588
    %v602 = vsel %vm352, %v594, %v587
    %v603 = vsel %vm369, %v602, %v585
    %v604 = vsel %vm370, %v601, %v584
    %v605 = vsel %vm371, %v600, %v583
    %v606 = vsel %vm372, %v599, %v582
    %v607 = vsel %vm373, %v598, %v581
    %v608 = vsel %vm374, %v597, %v580
    %v609 = vsel %vm375, %v596, %v579
    %v610 = vsel %vm376, %v595, %v586
    %v611 = vmin.f32 %v547, %v603
    %v612 = vmin.f32 %v548, %v604
    %v613 = vmin.f32 %v549, %v605
    %v614 = vmin.f32 %v550, %v606
    %v615 = vmin.f32 %v551, %v607
    %v616 = vmin.f32 %v552, %v608
    %v617 = vmin.f32 %v553, %v609
    %v618 = vmin.f32 %v554, %v610
    %v619 = vmax.f32 %v547, %v603
    %v620 = vmax.f32 %v548, %v604
    %v621 = vmax.f32 %v549, %v605
    %v622 = vmax.f32 %v550, %v606
    %v623 = vmax.f32 %v551, %v607
    %v624 = vmax.f32 %v552, %v608
    %v625 = vmax.f32 %v553, %v609
    %v626 = vmax.f32 %v554, %v610
    %v627 = vsel %vm563, 1, 0
    %v628 = vsel %vm564, 1, 0
    %v629 = vsel %vm565, 1, 0
    %v630 = vsel %vm566, 1, 0
    %v631 = vsel %vm567, 1, 0
    %v632 = vsel %vm568, 1, 0
    %v633 = vsel %vm569, 1, 0
    %v634 = vsel %vm570, 1, 0
    %vm635 = vcmp.eq.s32.totalorder %v627, 1
    %vm636 = vcmp.eq.s32.totalorder %v628, 1
    %vm637 = vcmp.eq.s32.totalorder %v629, 1
    %vm638 = vcmp.eq.s32.totalorder %v630, 1
    %vm639 = vcmp.eq.s32.totalorder %v631, 1
    %vm640 = vcmp.eq.s32.totalorder %v632, 1
    %vm641 = vcmp.eq.s32.totalorder %v633, 1
    %vm642 = vcmp.eq.s32.totalorder %v634, 1
    %v643 = vsel %vm635, %v611, %v619
    %v644 = vsel %vm636, %v612, %v620
    %v645 = vsel %vm637, %v613, %v621
    %v646 = vsel %vm638, %v614, %v622
    %v647 = vsel %vm639, %v615, %v623
    %v648 = vsel %vm640, %v616, %v624
    %v649 = vsel %vm641, %v617, %v625
    %v650 = vsel %vm642, %v618, %v626
    %v651 = vand.u32 %v239, 8
    %v652 = vand.u32 %v240, 8
    %v653 = vand.u32 %v241, 8
    %v654 = vand.u32 %v242, 8
    %v655 = vand.u32 %v243, 8
    %v656 = vand.u32 %v244, 8
    %v657 = vand.u32 %v245, 8
    %v658 = vand.u32 %v246, 8
    %vm659 = vcmp.ne.s32.totalorder %v651, 0
    %vm660 = vcmp.ne.s32.totalorder %v652, 0
    %vm661 = vcmp.ne.s32.totalorder %v653, 0
    %vm662 = vcmp.ne.s32.totalorder %v654, 0
    %vm663 = vcmp.ne.s32.totalorder %v655, 0
    %vm664 = vcmp.ne.s32.totalorder %v656, 0
    %vm665 = vcmp.ne.s32.totalorder %v657, 0
    %vm666 = vcmp.ne.s32.totalorder %v658, 0
    %vm667 = vmxor %vm433, %vm659
    %vm668 = vmxor %vm434, %vm660
    %vm669 = vmxor %vm435, %vm661
    %vm670 = vmxor %vm436, %vm662
    %vm671 = vmxor %vm437, %vm663
    %vm672 = vmxor %vm438, %vm664
    %vm673 = vmxor %vm439, %vm665
    %vm674 = vmxor %vm440, %vm666
    %vm675 = vmxor %vm667, 1
    %vm676 = vmxor %vm668, 1
    %vm677 = vmxor %vm669, 1
    %vm678 = vmxor %vm670, 1
    %vm679 = vmxor %vm671, 1
    %vm680 = vmxor %vm672, 1
    %vm681 = vmxor %vm673, 1
    %vm682 = vmxor %vm674, 1
    %v683 = vrot.slane %v643, 4
    %v684 = vrot.slane %v644, 4
    %v685 = vrot.slane %v645, 4
    %v686 = vrot.slane %v646, 4
    %v687 = vrot.slane %v647, 4
    %v688 = vrot.slane %v648, 4
    %v689 = vrot.slane %v649, 4
    %v690 = vrot.slane %v650, 4
    %vm691 = vcmp.lt.s32.totalorder %v231, 4
    %v692 = vsel %vm691, %v689, %v690
    %v693 = vsel %vm691, %v688, %v689
    %v694 = vsel %vm691, %v687, %v688
    %v695 = vsel %vm691, %v686, %v687
    %v696 = vsel %vm691, %v685, %v686
    %v697 = vsel %vm691, %v684, %v685
    %v698 = vsel %vm691, %v683, %v684
    %v699 = vsel %vm691, %v690, %v683
    %v700 = vsel %vm433, 1, 0
    %v701 = vsel %vm434, 1, 0
    %v702 = vsel %vm435, 1, 0
    %v703 = vsel %vm436, 1, 0
    %v704 = vsel %vm437, 1, 0
    %v705 = vsel %vm438, 1, 0
    %v706 = vsel %vm439, 1, 0
    %v707 = vsel %vm440, 1, 0
    %vm708 = vcmp.eq.s32.totalorder %v700, 1
    %vm709 = vcmp.eq.s32.totalorder %v701, 1
    %vm710 = vcmp.eq.s32.totalorder %v702, 1
    %vm711 = vcmp.eq.s32.totalorder %v703, 1
    %vm712 = vcmp.eq.s32.totalorder %v704, 1
    %vm713 = vcmp.eq.s32.totalorder %v705, 1
    %vm714 = vcmp.eq.s32.totalorder %v706, 1
    %vm715 = vcmp.eq.s32.totalorder %v707, 1
    %v716 = vsel %vm708, %v699, %v698
    %v717 = vsel %vm709, %v698, %v697
    %v718 = vsel %vm710, %v697, %v696
    %v719 = vsel %vm711, %v696, %v695
    %v720 = vsel %vm712, %v695, %v694
    %v721 = vsel %vm713, %v694, %v693
    %v722 = vsel %vm714, %v693, %v692
    %v723 = vsel %vm715, %v692, %v699
    %v724 = vmin.f32 %v643, %v716
    %v725 = vmin.f32 %v644, %v717
    %v726 = vmin.f32 %v645, %v718
    %v727 = vmin.f32 %v646, %v719
    %v728 = vmin.f32 %v647, %v720
    %v729 = vmin.f32 %v648, %v721
    %v730 = vmin.f32 %v649, %v722
    %v731 = vmin.f32 %v650, %v723
    %v732 = vmax.f32 %v643, %v716
    %v733 = vmax.f32 %v644, %v717
    %v734 = vmax.f32 %v645, %v718
    %v735 = vmax.f32 %v646, %v719
    %v736 = vmax.f32 %v647, %v720
    %v737 = vmax.f32 %v648, %v721
    %v738 = vmax.f32 %v649, %v722
    %v739 = vmax.f32 %v650, %v723
    %v740 = vsel %vm675, 1, 0
    %v741 = vsel %vm676, 1, 0
    %v742 = vsel %vm677, 1, 0
    %v743 = vsel %vm678, 1, 0
    %v744 = vsel %vm679, 1, 0
    %v745 = vsel %vm680, 1, 0
    %v746 = vsel %vm681, 1, 0
    %v747 = vsel %vm682, 1, 0
    %vm748 = vcmp.eq.s32.totalorder %v740, 1
    %vm749 = vcmp.eq.s32.totalorder %v741, 1
    %vm750 = vcmp.eq.s32.totalorder %v742, 1
    %vm751 = vcmp.eq.s32.totalorder %v743, 1
    %vm752 = vcmp.eq.s32.totalorder %v744, 1
    %vm753 = vcmp.eq.s32.totalorder %v745, 1
    %vm754 = vcmp.eq.s32.totalorder %v746, 1
    %vm755 = vcmp.eq.s32.totalorder %v747, 1
    %v756 = vsel %vm748, %v724, %v732
    %v757 = vsel %vm749, %v725, %v733
    %v758 = vsel %vm750, %v726, %v734
    %v759 = vsel %vm751, %v727, %v735
    %v760 = vsel %vm752, %v728, %v736
    %v761 = vsel %vm753, %v729, %v737
    %v762 = vsel %vm754, %v730, %v738
    %v763 = vsel %vm755, %v731, %v739
    %vm764 = vmxor %vm303, %vm659
    %vm765 = vmxor %vm304, %vm660
    %vm766 = vmxor %vm305, %vm661
    %vm767 = vmxor %vm306, %vm662
    %vm768 = vmxor %vm307, %vm663
    %vm769 = vmxor %vm308, %vm664
    %vm770 = vmxor %vm309, %vm665
    %vm771 = vmxor %vm310, %vm666
    %vm772 = vmxor %vm764, 1
    %vm773 = vmxor %vm765, 1
    %vm774 = vmxor %vm766, 1
    %vm775 = vmxor %vm767, 1
    %vm776 = vmxor %vm768, 1
    %vm777 = vmxor %vm769, 1
    %vm778 = vmxor %vm770, 1
    %vm779 = vmxor %vm771, 1
    %v780 = vrot.slane %v756, 2
    %v781 = vrot.slane %v757, 2
    %v782 = vrot.slane %v758, 2
    %v783 = vrot.slane %v759, 2
    %v784 = vrot.slane %v760, 2
    %v785 = vrot.slane %v761, 2
    %v786 = vrot.slane %v762, 2
    %v787 = vrot.slane %v763, 2
    %v788 = vsel %vm465, %v786, %v787
    %v789 = vsel %vm465, %v785, %v786
    %v790 = vsel %vm465, %v784, %v785
    %v791 = vsel %vm465, %v783, %v784
    %v792 = vsel %vm465, %v782, %v783
    %v793 = vsel %vm465, %v781, %v782
    %v794 = vsel %vm465, %v780, %v781
    %v795 = vsel %vm465, %v787, %v780
    %v796 = vrot.slane %v756, 6
    %v797 = vrot.slane %v757, 6
    %v798 = vrot.slane %v758, 6
    %v799 = vrot.slane %v759, 6
    %v800 = vrot.slane %v760, 6
    %v801 = vrot.slane %v761, 6
    %v802 = vrot.slane %v762, 6
    %v803 = vrot.slane %v763, 6
    %v804 = vsel %vm482, %v802, %v803
    %v805 = vsel %vm482, %v801, %v802
    %v806 = vsel %vm482, %v800, %v801
    %v807 = vsel %vm482, %v799, %v800
    %v808 = vsel %vm482, %v798, %v799
    %v809 = vsel %vm482, %v797, %v798
    %v810 = vsel %vm482, %v796, %v797
    %v811 = vsel %vm482, %v803, %v796
    %v812 = vsel %vm499, %v811, %v794
    %v813 = vsel %vm500, %v810, %v793
    %v814 = vsel %vm501, %v809, %v792
    %v815 = vsel %vm502, %v808, %v791
    %v816 = vsel %vm503, %v807, %v790
    %v817 = vsel %vm504, %v806, %v789
    %v818 = vsel %vm505, %v805, %v788
    %v819 = vsel %vm506, %v804, %v795
    %v820 = vmin.f32 %v756, %v812
    %v821 = vmin.f32 %v757, %v813
    %v822 = vmin.f32 %v758, %v814
    %v823 = vmin.f32 %v759, %v815
    %v824 = vmin.f32 %v760, %v816
    %v825 = vmin.f32 %v761, %v817
    %v826 = vmin.f32 %v762, %v818
    %v827 = vmin.f32 %v763, %v819
    %v828 = vmax.f32 %v756, %v812
    %v829 = vmax.f32 %v757, %v813
    %v830 = vmax.f32 %v758, %v814
    %v831 = vmax.f32 %v759, %v815
    %v832 = vmax.f32 %v760, %v816
    %v833 = vmax.f32 %v761, %v817
    %v834 = vmax.f32 %v762, %v818
    %v835 = vmax.f32 %v763, %v819
    %v836 = vsel %vm772, 1, 0
    %v837 = vsel %vm773, 1, 0
    %v838 = vsel %vm774, 1, 0
    %v839 = vsel %vm775, 1, 0
    %v840 = vsel %vm776, 1, 0
    %v841 = vsel %vm777, 1, 0
    %v842 = vsel %vm778, 1, 0
    %v843 = vsel %vm779, 1, 0
    %vm844 = vcmp.eq.s32.totalorder %v836, 1
    %vm845 = vcmp.eq.s32.totalorder %v837, 1
    %vm846 = vcmp.eq.s32.totalorder %v838, 1
    %vm847 = vcmp.eq.s32.totalorder %v839, 1
    %vm848 = vcmp.eq.s32.totalorder %v840, 1
    %vm849 = vcmp.eq.s32.totalorder %v841, 1
    %vm850 = vcmp.eq.s32.totalorder %v842, 1
    %vm851 = vcmp.eq.s32.totalorder %v843, 1
    %v852 = vsel %vm844, %v820, %v828
    %v853 = vsel %vm845, %v821, %v829
    %v854 = vsel %vm846, %v822, %v830
    %v855 = vsel %vm847, %v823, %v831
    %v856 = vsel %vm848, %v824, %v832
    %v857 = vsel %vm849, %v825, %v833
    %v858 = vsel %vm850, %v826, %v834
    %v859 = vsel %vm851, %v827, %v835
    %vm860 = vmxor %vm287, %vm659
    %vm861 = vmxor %vm288, %vm660
    %vm862 = vmxor %vm289, %vm661
    %vm863 = vmxor %vm290, %vm662
    %vm864 = vmxor %vm291, %vm663
    %vm865 = vmxor %vm292, %vm664
    %vm866 = vmxor %vm293, %vm665
    %vm867 = vmxor %vm294, %vm666
    %vm868 = vmxor %vm860, 1
    %vm869 = vmxor %vm861, 1
    %vm870 = vmxor %vm862, 1
    %vm871 = vmxor %vm863, 1
    %vm872 = vmxor %vm864, 1
    %vm873 = vmxor %vm865, 1
    %vm874 = vmxor %vm866, 1
    %vm875 = vmxor %vm867, 1
    %v876 = vrot.slane %v852, 1
    %v877 = vrot.slane %v853, 1
    %v878 = vrot.slane %v854, 1
    %v879 = vrot.slane %v855, 1
    %v880 = vrot.slane %v856, 1
    %v881 = vrot.slane %v857, 1
    %v882 = vrot.slane %v858, 1
    %v883 = vrot.slane %v859, 1
    %v884 = vsel %vm335, %v882, %v883
    %v885 = vsel %vm335, %v881, %v882
    %v886 = vsel %vm335, %v880, %v881
    %v887 = vsel %vm335, %v879, %v880
    %v888 = vsel %vm335, %v878, %v879
    %v889 = vsel %vm335, %v877, %v878
    %v890 = vsel %vm335, %v876, %v877
    %v891 = vsel %vm335, %v883, %v876
    %v892 = vrot.slane %v852, 7
    %v893 = vrot.slane %v853, 7
    %v894 = vrot.slane %v854, 7
    %v895 = vrot.slane %v855, 7
    %v896 = vrot.slane %v856, 7
    %v897 = vrot.slane %v857, 7
    %v898 = vrot.slane %v858, 7
    %v899 = vrot.slane %v859, 7
    %v900 = vsel %vm352, %v898, %v899
    %v901 = vsel %vm352, %v897, %v898
    %v902 = vsel %vm352, %v896, %v897
    %v903 = vsel %vm352, %v895, %v896
    %v904 = vsel %vm352, %v894, %v895
    %v905 = vsel %vm352, %v893, %v894
    %v906 = vsel %vm352, %v892, %v893
    %v907 = vsel %vm352, %v899, %v892
    %v908 = vsel %vm369, %v907, %v890
    %v909 = vsel %vm370, %v906, %v889
    %v910 = vsel %vm371, %v905, %v888
    %v911 = vsel %vm372, %v904, %v887
    %v912 = vsel %vm373, %v903, %v886
    %v913 = vsel %vm374, %v902, %v885
    %v914 = vsel %vm375, %v901, %v884
    %v915 = vsel %vm376, %v900, %v891
    %v916 = vmin.f32 %v852, %v908
    %v917 = vmin.f32 %v853, %v909
    %v918 = vmin.f32 %v854, %v910
    %v919 = vmin.f32 %v855, %v911
    %v920 = vmin.f32 %v856, %v912
    %v921 = vmin.f32 %v857, %v913
    %v922 = vmin.f32 %v858, %v914
    %v923 = vmin.f32 %v859, %v915
    %v924 = vmax.f32 %v852, %v908
    %v925 = vmax.f32 %v853, %v909
    %v926 = vmax.f32 %v854, %v910
    %v927 = vmax.f32 %v855, %v911
    %v928 = vmax.f32 %v856, %v912
    %v929 = vmax.f32 %v857, %v913
    %v930 = vmax.f32 %v858, %v914
    %v931 = vmax.f32 %v859, %v915
    %v932 = vsel %vm868, 1, 0
    %v933 = vsel %vm869, 1, 0
    %v934 = vsel %vm870, 1, 0
    %v935 = vsel %vm871, 1, 0
    %v936 = vsel %vm872, 1, 0
    %v937 = vsel %vm873, 1, 0
    %v938 = vsel %vm874, 1, 0
    %v939 = vsel %vm875, 1, 0
    %vm940 = vcmp.eq.s32.totalorder %v932, 1
    %vm941 = vcmp.eq.s32.totalorder %v933, 1
    %vm942 = vcmp.eq.s32.totalorder %v934, 1
    %vm943 = vcmp.eq.s32.totalorder %v935, 1
    %vm944 = vcmp.eq.s32.totalorder %v936, 1
    %vm945 = vcmp.eq.s32.totalorder %v937, 1
    %vm946 = vcmp.eq.s32.totalorder %v938, 1
    %vm947 = vcmp.eq.s32.totalorder %v939, 1
    %v948 = vsel %vm940, %v916, %v924
    %v949 = vsel %vm941, %v917, %v925
    %v950 = vsel %vm942, %v918, %v926
    %v951 = vsel %vm943, %v919, %v927
    %v952 = vsel %vm944, %v920, %v928
    %v953 = vsel %vm945, %v921, %v929
    %v954 = vsel %vm946, %v922, %v930
    %v955 = vsel %vm947, %v923, %v931
    %v956 = vand.u32 %v239, 16
    %v957 = vand.u32 %v240, 16
    %v958 = vand.u32 %v241, 16
    %v959 = vand.u32 %v242, 16
    %v960 = vand.u32 %v243, 16
    %v961 = vand.u32 %v244, 16
    %v962 = vand.u32 %v245, 16
    %v963 = vand.u32 %v246, 16
    %vm964 = vcmp.ne.s32.totalorder %v956, 0
    %vm965 = vcmp.ne.s32.totalorder %v957, 0
    %vm966 = vcmp.ne.s32.totalorder %v958, 0
    %vm967 = vcmp.ne.s32.totalorder %v959, 0
    %vm968 = vcmp.ne.s32.totalorder %v960, 0
    %vm969 = vcmp.ne.s32.totalorder %v961, 0
    %vm970 = vcmp.ne.s32.totalorder %v962, 0
    %vm971 = vcmp.ne.s32.totalorder %v963, 0
    %vm972 = vmxor %vm659, %vm964
    %vm973 = vmxor %vm660, %vm965
    %vm974 = vmxor %vm661, %vm966
    %vm975 = vmxor %vm662, %vm967
    %vm976 = vmxor %vm663, %vm968
    %vm977 = vmxor %vm664, %vm969
    %vm978 = vmxor %vm665, %vm970
    %vm979 = vmxor %vm666, %vm971
    %vm980 = vmxor %vm972, 1
    %vm981 = vmxor %vm973, 1
    %vm982 = vmxor %vm974, 1
    %vm983 = vmxor %vm975, 1
    %vm984 = vmxor %vm976, 1
    %vm985 = vmxor %vm977, 1
    %vm986 = vmxor %vm978, 1
    %vm987 = vmxor %vm979, 1
    %v988 = vsel %vm659, 1, 0
    %v989 = vsel %vm660, 1, 0
    %v990 = vsel %vm661, 1, 0
    %v991 = vsel %vm662, 1, 0
    %v992 = vsel %vm663, 1, 0
    %v993 = vsel %vm664, 1, 0
    %v994 = vsel %vm665, 1, 0
    %v995 = vsel %vm666, 1, 0
    %vm996 = vcmp.eq.s32.totalorder %v988, 1
    %vm997 = vcmp.eq.s32.totalorder %v989, 1
    %vm998 = vcmp.eq.s32.totalorder %v990, 1
    %vm999 = vcmp.eq.s32.totalorder %v991, 1
    %vm1000 = vcmp.eq.s32.totalorder %v992, 1
    %vm1001 = vcmp.eq.s32.totalorder %v993, 1
    %vm1002 = vcmp.eq.s32.totalorder %v994, 1
    %vm1003 = vcmp.eq.s32.totalorder %v995, 1
    %v1004 = vsel %vm996, %v955, %v949
    %v1005 = vsel %vm997, %v948, %v950
    %v1006 = vsel %vm998, %v949, %v951
    %v1007 = vsel %vm999, %v950, %v952
    %v1008 = vsel %vm1000, %v951, %v953
    %v1009 = vsel %vm1001, %v952, %v954
    %v1010 = vsel %vm1002, %v953, %v955
    %v1011 = vsel %vm1003, %v954, %v948
    %v1012 = vmin.f32 %v948, %v1004
    %v1013 = vmin.f32 %v949, %v1005
    %v1014 = vmin.f32 %v950, %v1006
    %v1015 = vmin.f32 %v951, %v1007
    %v1016 = vmin.f32 %v952, %v1008
    %v1017 = vmin.f32 %v953, %v1009
    %v1018 = vmin.f32 %v954, %v1010
    %v1019 = vmin.f32 %v955, %v1011
    %v1020 = vmax.f32 %v948, %v1004
    %v1021 = vmax.f32 %v949, %v1005
    %v1022 = vmax.f32 %v950, %v1006
    %v1023 = vmax.f32 %v951, %v1007
    %v1024 = vmax.f32 %v952, %v1008
    %v1025 = vmax.f32 %v953, %v1009
    %v1026 = vmax.f32 %v954, %v1010
    %v1027 = vmax.f32 %v955, %v1011
    %v1028 = vsel %vm980, 1, 0
    %v1029 = vsel %vm981, 1, 0
    %v1030 = vsel %vm982, 1, 0
    %v1031 = vsel %vm983, 1, 0
    %v1032 = vsel %vm984, 1, 0
    %v1033 = vsel %vm985, 1, 0
    %v1034 = vsel %vm986, 1, 0
    %v1035 = vsel %vm987, 1, 0
    %vm1036 = vcmp.eq.s32.totalorder %v1028, 1
    %vm1037 = vcmp.eq.s32.totalorder %v1029, 1
    %vm1038 = vcmp.eq.s32.totalorder %v1030, 1
    %vm1039 = vcmp.eq.s32.totalorder %v1031, 1
    %vm1040 = vcmp.eq.s32.totalorder %v1032, 1
    %vm1041 = vcmp.eq.s32.totalorder %v1033, 1
    %vm1042 = vcmp.eq.s32.totalorder %v1034, 1
    %vm1043 = vcmp.eq.s32.totalorder %v1035, 1
    %v1044 = vsel %vm1036, %v1012, %v1020
    %v1045 = vsel %vm1037, %v1013, %v1021
    %v1046 = vsel %vm1038, %v1014, %v1022
    %v1047 = vsel %vm1039, %v1015, %v1023
    %v1048 = vsel %vm1040, %v1016, %v1024
    %v1049 = vsel %vm1041, %v1017, %v1025
    %v1050 = vsel %vm1042, %v1018, %v1026
    %v1051 = vsel %vm1043, %v1019, %v1027
    %vm1052 = vmxor %vm433, %vm964
    %vm1053 = vmxor %vm434, %vm965
    %vm1054 = vmxor %vm435, %vm966
    %vm1055 = vmxor %vm436, %vm967
    %vm1056 = vmxor %vm437, %vm968
    %vm1057 = vmxor %vm438, %vm969
    %vm1058 = vmxor %vm439, %vm970
    %vm1059 = vmxor %vm440, %vm971
    %vm1060 = vmxor %vm1052, 1
    %vm1061 = vmxor %vm1053, 1
    %vm1062 = vmxor %vm1054, 1
    %vm1063 = vmxor %vm1055, 1
    %vm1064 = vmxor %vm1056, 1
    %vm1065 = vmxor %vm1057, 1
    %vm1066 = vmxor %vm1058, 1
    %vm1067 = vmxor %vm1059, 1
    %v1068 = vrot.slane %v1044, 4
    %v1069 = vrot.slane %v1045, 4
    %v1070 = vrot.slane %v1046, 4
    %v1071 = vrot.slane %v1047, 4
    %v1072 = vrot.slane %v1048, 4
    %v1073 = vrot.slane %v1049, 4
    %v1074 = vrot.slane %v1050, 4
    %v1075 = vrot.slane %v1051, 4
    %v1076 = vsel %vm691, %v1074, %v1075
    %v1077 = vsel %vm691, %v1073, %v1074
    %v1078 = vsel %vm691, %v1072, %v1073
    %v1079 = vsel %vm691, %v1071, %v1072
    %v1080 = vsel %vm691, %v1070, %v1071
    %v1081 = vsel %vm691, %v1069, %v1070
    %v1082 = vsel %vm691, %v1068, %v1069
    %v1083 = vsel %vm691, %v1075, %v1068
    %v1084 = vsel %vm708, %v1083, %v1082
    %v1085 = vsel %vm709, %v1082, %v1081
    %v1086 = vsel %vm710, %v1081, %v1080
    %v1087 = vsel %vm711, %v1080, %v1079
    %v1088 = vsel %vm712, %v1079, %v1078
    %v1089 = vsel %vm713, %v1078, %v1077
    %v1090 = vsel %vm714, %v1077, %v1076
    %v1091 = vsel %vm715, %v1076, %v1083
    %v1092 = vmin.f32 %v1044, %v1084
    %v1093 = vmin.f32 %v1045, %v1085
    %v1094 = vmin.f32 %v1046, %v1086
    %v1095 = vmin.f32 %v1047, %v1087
    %v1096 = vmin.f32 %v1048, %v1088
    %v1097 = vmin.f32 %v1049, %v1089
    %v1098 = vmin.f32 %v1050, %v1090
    %v1099 = vmin.f32 %v1051, %v1091
    %v1100 = vmax.f32 %v1044, %v1084
    %v1101 = vmax.f32 %v1045, %v1085
    %v1102 = vmax.f32 %v1046, %v1086
    %v1103 = vmax.f32 %v1047, %v1087
    %v1104 = vmax.f32 %v1048, %v1088
    %v1105 = vmax.f32 %v1049, %v1089
    %v1106 = vmax.f32 %v1050, %v1090
    %v1107 = vmax.f32 %v1051, %v1091
    %v1108 = vsel %vm1060, 1, 0
    %v1109 = vsel %vm1061, 1, 0
    %v1110 = vsel %vm1062, 1, 0
    %v1111 = vsel %vm1063, 1, 0
    %v1112 = vsel %vm1064, 1, 0
    %v1113 = vsel %vm1065, 1, 0
    %v1114 = vsel %vm1066, 1, 0
    %v1115 = vsel %vm1067, 1, 0
    %vm1116 = vcmp.eq.s32.totalorder %v1108, 1
    %vm1117 = vcmp.eq.s32.totalorder %v1109, 1
    %vm1118 = vcmp.eq.s32.totalorder %v1110, 1
    %vm1119 = vcmp.eq.s32.totalorder %v1111, 1
    %vm1120 = vcmp.eq.s32.totalorder %v1112, 1
    %vm1121 = vcmp.eq.s32.totalorder %v1113, 1
    %vm1122 = vcmp.eq.s32.totalorder %v1114, 1
    %vm1123 = vcmp.eq.s32.totalorder %v1115, 1
    %v1124 = vsel %vm1116, %v1092, %v1100
    %v1125 = vsel %vm1117, %v1093, %v1101
    %v1126 = vsel %vm1118, %v1094, %v1102
    %v1127 = vsel %vm1119, %v1095, %v1103
    %v1128 = vsel %vm1120, %v1096, %v1104
    %v1129 = vsel %vm1121, %v1097, %v1105
    %v1130 = vsel %vm1122, %v1098, %v1106
    %v1131 = vsel %vm1123, %v1099, %v1107
    %vm1132 = vmxor %vm303, %vm964
    %vm1133 = vmxor %vm304, %vm965
    %vm1134 = vmxor %vm305, %vm966
    %vm1135 = vmxor %vm306, %vm967
    %vm1136 = vmxor %vm307, %vm968
    %vm1137 = vmxor %vm308, %vm969
    %vm1138 = vmxor %vm309, %vm970
    %vm1139 = vmxor %vm310, %vm971
    %vm1140 = vmxor %vm1132, 1
    %vm1141 = vmxor %vm1133, 1
    %vm1142 = vmxor %vm1134, 1
    %vm1143 = vmxor %vm1135, 1
    %vm1144 = vmxor %vm1136, 1
    %vm1145 = vmxor %vm1137, 1
    %vm1146 = vmxor %vm1138, 1
    %vm1147 = vmxor %vm1139, 1
    %v1148 = vrot.slane %v1124, 2
    %v1149 = vrot.slane %v1125, 2
    %v1150 = vrot.slane %v1126, 2
    %v1151 = vrot.slane %v1127, 2
    %v1152 = vrot.slane %v1128, 2
    %v1153 = vrot.slane %v1129, 2
    %v1154 = vrot.slane %v1130, 2
    %v1155 = vrot.slane %v1131, 2
    %v1156 = vsel %vm465, %v1154, %v1155
    %v1157 = vsel %vm465, %v1153, %v1154
    %v1158 = vsel %vm465, %v1152, %v1153
    %v1159 = vsel %vm465, %v1151, %v1152
    %v1160 = vsel %vm465, %v1150, %v1151
    %v1161 = vsel %vm465, %v1149, %v1150
    %v1162 = vsel %vm465, %v1148, %v1149
    %v1163 = vsel %vm465, %v1155, %v1148
    %v1164 = vrot.slane %v1124, 6
    %v1165 = vrot.slane %v1125, 6
    %v1166 = vrot.slane %v1126, 6
    %v1167 = vrot.slane %v1127, 6
    %v1168 = vrot.slane %v1128, 6
    %v1169 = vrot.slane %v1129, 6
    %v1170 = vrot.slane %v1130, 6
    %v1171 = vrot.slane %v1131, 6
    %v1172 = vsel %vm482, %v1170, %v1171
    %v1173 = vsel %vm482, %v1169, %v1170
    %v1174 = vsel %vm482, %v1168, %v1169
    %v1175 = vsel %vm482, %v1167, %v1168
    %v1176 = vsel %vm482, %v1166, %v1167
    %v1177 = vsel %vm482, %v1165, %v1166
    %v1178 = vsel %vm482, %v1164, %v1165
    %v1179 = vsel %vm482, %v1171, %v1164
    %v1180 = vsel %vm499, %v1179, %v1162
    %v1181 = vsel %vm500, %v1178, %v1161
    %v1182 = vsel %vm501, %v1177, %v1160
    %v1183 = vsel %vm502, %v1176, %v1159
    %v1184 = vsel %vm503, %v1175, %v1158
    %v1185 = vsel %vm504, %v1174, %v1157
    %v1186 = vsel %vm505, %v1173, %v1156
    %v1187 = vsel %vm506, %v1172, %v1163
    %v1188 = vmin.f32 %v1124, %v1180
    %v1189 = vmin.f32 %v1125, %v1181
    %v1190 = vmin.f32 %v1126, %v1182
    %v1191 = vmin.f32 %v1127, %v1183
    %v1192 = vmin.f32 %v1128, %v1184
    %v1193 = vmin.f32 %v1129, %v1185
    %v1194 = vmin.f32 %v1130, %v1186
    %v1195 = vmin.f32 %v1131, %v1187
    %v1196 = vmax.f32 %v1124, %v1180
    %v1197 = vmax.f32 %v1125, %v1181
    %v1198 = vmax.f32 %v1126, %v1182
    %v1199 = vmax.f32 %v1127, %v1183
    %v1200 = vmax.f32 %v1128, %v1184
    %v1201 = vmax.f32 %v1129, %v1185
    %v1202 = vmax.f32 %v1130, %v1186
    %v1203 = vmax.f32 %v1131, %v1187
    %v1204 = vsel %vm1140, 1, 0
    %v1205 = vsel %vm1141, 1, 0
    %v1206 = vsel %vm1142, 1, 0
    %v1207 = vsel %vm1143, 1, 0
    %v1208 = vsel %vm1144, 1, 0
    %v1209 = vsel %vm1145, 1, 0
    %v1210 = vsel %vm1146, 1, 0
    %v1211 = vsel %vm1147, 1, 0
    %vm1212 = vcmp.eq.s32.totalorder %v1204, 1
    %vm1213 = vcmp.eq.s32.totalorder %v1205, 1
    %vm1214 = vcmp.eq.s32.totalorder %v1206, 1
    %vm1215 = vcmp.eq.s32.totalorder %v1207, 1
    %vm1216 = vcmp.eq.s32.totalorder %v1208, 1
    %vm1217 = vcmp.eq.s32.totalorder %v1209, 1
    %vm1218 = vcmp.eq.s32.totalorder %v1210, 1
    %vm1219 = vcmp.eq.s32.totalorder %v1211, 1
    %v1220 = vsel %vm1212, %v1188, %v1196
    %v1221 = vsel %vm1213, %v1189, %v1197
    %v1222 = vsel %vm1214, %v1190, %v1198
    %v1223 = vsel %vm1215, %v1191, %v1199
    %v1224 = vsel %vm1216, %v1192, %v1200
    %v1225 = vsel %vm1217, %v1193, %v1201
    %v1226 = vsel %vm1218, %v1194, %v1202
    %v1227 = vsel %vm1219, %v1195, %v1203
    %vm1228 = vmxor %vm287, %vm964
    %vm1229 = vmxor %vm288, %vm965
    %vm1230 = vmxor %vm289, %vm966
    %vm1231 = vmxor %vm290, %vm967
    %vm1232 = vmxor %vm291, %vm968
    %vm1233 = vmxor %vm292, %vm969
    %vm1234 = vmxor %vm293, %vm970
    %vm1235 = vmxor %vm294, %vm971
    %vm1236 = vmxor %vm1228, 1
    %vm1237 = vmxor %vm1229, 1
    %vm1238 = vmxor %vm1230, 1
    %vm1239 = vmxor %vm1231, 1
    %vm1240 = vmxor %vm1232, 1
    %vm1241 = vmxor %vm1233, 1
    %vm1242 = vmxor %vm1234, 1
    %vm1243 = vmxor %vm1235, 1
    %v1244 = vrot.slane %v1220, 1
    %v1245 = vrot.slane %v1221, 1
    %v1246 = vrot.slane %v1222, 1
    %v1247 = vrot.slane %v1223, 1
    %v1248 = vrot.slane %v1224, 1
    %v1249 = vrot.slane %v1225, 1
    %v1250 = vrot.slane %v1226, 1
    %v1251 = vrot.slane %v1227, 1
    %v1252 = vsel %vm335, %v1250, %v1251
    %v1253 = vsel %vm335, %v1249, %v1250
    %v1254 = vsel %vm335, %v1248, %v1249
    %v1255 = vsel %vm335, %v1247, %v1248
    %v1256 = vsel %vm335, %v1246, %v1247
    %v1257 = vsel %vm335, %v1245, %v1246
    %v1258 = vsel %vm335, %v1244, %v1245
    %v1259 = vsel %vm335, %v1251, %v1244
    %v1260 = vrot.slane %v1220, 7
    %v1261 = vrot.slane %v1221, 7
    %v1262 = vrot.slane %v1222, 7
    %v1263 = vrot.slane %v1223, 7
    %v1264 = vrot.slane %v1224, 7
    %v1265 = vrot.slane %v1225, 7
    %v1266 = vrot.slane %v1226, 7
    %v1267 = vrot.slane %v1227, 7
    %v1268 = vsel %vm352, %v1266, %v1267
    %v1269 = vsel %vm352, %v1265, %v1266
    %v1270 = vsel %vm352, %v1264, %v1265
    %v1271 = vsel %vm352, %v1263, %v1264
    %v1272 = vsel %vm352, %v1262, %v1263
    %v1273 = vsel %vm352, %v1261, %v1262
    %v1274 = vsel %vm352, %v1260, %v1261
    %v1275 = vsel %vm352, %v1267, %v1260
    %v1276 = vsel %vm369, %v1275, %v1258
    %v1277 = vsel %vm370, %v1274, %v1257
    %v1278 = vsel %vm371, %v1273, %v1256
    %v1279 = vsel %vm372, %v1272, %v1255
    %v1280 = vsel %vm373, %v1271, %v1254
    %v1281 = vsel %vm374, %v1270, %v1253
    %v1282 = vsel %vm375, %v1269, %v1252
    %v1283 = vsel %vm376, %v1268, %v1259
    %v1284 = vmin.f32 %v1220, %v1276
    %v1285 = vmin.f32 %v1221, %v1277
    %v1286 = vmin.f32 %v1222, %v1278
    %v1287 = vmin.f32 %v1223, %v1279
    %v1288 = vmin.f32 %v1224, %v1280
    %v1289 = vmin.f32 %v1225, %v1281
    %v1290 = vmin.f32 %v1226, %v1282
    %v1291 = vmin.f32 %v1227, %v1283
    %v1292 = vmax.f32 %v1220, %v1276
    %v1293 = vmax.f32 %v1221, %v1277
    %v1294 = vmax.f32 %v1222, %v1278
    %v1295 = vmax.f32 %v1223, %v1279
    %v1296 = vmax.f32 %v1224, %v1280
    %v1297 = vmax.f32 %v1225, %v1281
    %v1298 = vmax.f32 %v1226, %v1282
    %v1299 = vmax.f32 %v1227, %v1283
    %v1300 = vsel %vm1236, 1, 0
    %v1301 = vsel %vm1237, 1, 0
    %v1302 = vsel %vm1238, 1, 0
    %v1303 = vsel %vm1239, 1, 0
    %v1304 = vsel %vm1240, 1, 0
    %v1305 = vsel %vm1241, 1, 0
    %v1306 = vsel %vm1242, 1, 0
    %v1307 = vsel %vm1243, 1, 0
    %vm1308 = vcmp.eq.s32.totalorder %v1300, 1
    %vm1309 = vcmp.eq.s32.totalorder %v1301, 1
    %vm1310 = vcmp.eq.s32.totalorder %v1302, 1
    %vm1311 = vcmp.eq.s32.totalorder %v1303, 1
    %vm1312 = vcmp.eq.s32.totalorder %v1304, 1
    %vm1313 = vcmp.eq.s32.totalorder %v1305, 1
    %vm1314 = vcmp.eq.s32.totalorder %v1306, 1
    %vm1315 = vcmp.eq.s32.totalorder %v1307, 1
    %v1316 = vsel %vm1308, %v1284, %v1292
    %v1317 = vsel %vm1309, %v1285, %v1293
    %v1318 = vsel %vm1310, %v1286, %v1294
    %v1319 = vsel %vm1311, %v1287, %v1295
    %v1320 = vsel %vm1312, %v1288, %v1296
    %v1321 = vsel %vm1313, %v1289, %v1297
    %v1322 = vsel %vm1314, %v1290, %v1298
    %v1323 = vsel %vm1315, %v1291, %v1299
    %vm1324 = vcmp.eq.s32.totalorder %v239, 7
    %vm1325 = vcmp.eq.s32.totalorder %v240, 7
    %vm1326 = vcmp.eq.s32.totalorder %v241, 7
    %vm1327 = vcmp.eq.s32.totalorder %v242, 7
    %vm1328 = vcmp.eq.s32.totalorder %v243, 7
    %vm1329 = vcmp.eq.s32.totalorder %v244, 7
    %vm1330 = vcmp.eq.s32.totalorder %v245, 7
    %vm1331 = vcmp.eq.s32.totalorder %v246, 7
    %v1332 = vsel %vm1324, 1, 0
    %v1333 = vsel %vm1325, 1, 0
    %v1334 = vsel %vm1326, 1, 0
    %v1335 = vsel %vm1327, 1, 0
    %v1336 = vsel %vm1328, 1, 0
    %v1337 = vsel %vm1329, 1, 0
    %v1338 = vsel %vm1330, 1, 0
    %v1339 = vsel %vm1331, 1, 0
    %v1340 = vcvt.s32.f32 %v1332
    %v1341 = vcvt.s32.f32 %v1333
    %v1342 = vcvt.s32.f32 %v1334
    %v1343 = vcvt.s32.f32 %v1335
    %v1344 = vcvt.s32.f32 %v1336
    %v1345 = vcvt.s32.f32 %v1337
    %v1346 = vcvt.s32.f32 %v1338
    %v1347 = vcvt.s32.f32 %v1339
    %v1348 = vmul.f32 %v1316, %v1340
    %v1349 = vmul.f32 %v1317, %v1341
    %v1350 = vmul.f32 %v1318, %v1342
    %v1351 = vmul.f32 %v1319, %v1343
    %v1352 = vmul.f32 %v1320, %v1344
    %v1353 = vmul.f32 %v1321, %v1345
    %v1354 = vmul.f32 %v1322, %v1346
    %v1355 = vmul.f32 %v1323, %v1347
    %v1356 = vadd.f32 %v1348, %v1349
    %v1357 = vrot.slane %v1356, 4
    %v1358 = vadd.f32 %v1356, %v1357
    %v1359 = vrot.slane %v1358, 2
    %v1360 = vadd.f32 %v1358, %v1359
    %v1361 = vrot.slane %v1360, 1
    %v1362 = vadd.f32 %v1360, %v1361
    %v1363 = vadd.f32 %v1350, %v1351
    %v1364 = vrot.slane %v1363, 4
    %v1365 = vadd.f32 %v1363, %v1364
    %v1366 = vrot.slane %v1365, 2
    %v1367 = vadd.f32 %v1365, %v1366
    %v1368 = vrot.slane %v1367, 1
    %v1369 = vadd.f32 %v1367, %v1368
    %v1370 = vadd.f32 %v1352, %v1353
    %v1371 = vrot.slane %v1370, 4
    %v1372 = vadd.f32 %v1370, %v1371
    %v1373 = vrot.slane %v1372, 2
    %v1374 = vadd.f32 %v1372, %v1373
    %v1375 = vrot.slane %v1374, 1
    %v1376 = vadd.f32 %v1374, %v1375
    %v1377 = vadd.f32 %v1354, %v1355
    %v1378 = vrot.slane %v1377, 4
    %v1379 = vadd.f32 %v1377, %v1378
    %v1380 = vrot.slane %v1379, 2
    %v1381 = vadd.f32 %v1379, %v1380
    %v1382 = vrot.slane %v1381, 1
    %v1383 = vadd.f32 %v1381, %v1382
    %v1384 = vld [vmem:[%s2] sm:$0x1]
    %vm1385 = vcmp.gt.f32.partialorder %v1376, 0.0
    %vm1386 = vcmp.gt.f32.partialorder %v1383, 0.0
    %v1387 = vsel %vm1385, %v1376, 1.0
    %v1388 = vsel %vm1386, %v1383, 1.0
    %v1390 = vlaneseq
    %v1391 = vshrl.u32 %v1390, 7
    %v1392 = vsub.s32 0, %v1391
    %v1393 = vrot.slane %v1384, %v1392
    %vm1397 = vcmask 1041409
    %v1398 = vsel %vm1397, %v1369, %v1362
    %v1400 = vmul.f32 %v1393, %v1398
    %v1401 = vrcp.pop %v1387
    %v1402 = vrcp.pop %v1388
    %v1405 = vsel %vm1397, %v1402, %v1401
    %v1407 = vmul.f32 %v1400, %v1405
    %1408 = vst [vmem:[#allocation7] sm:$0x3] %v1407
    // Predicated region
    $region22: #{tpu_custom_call.1} parent=1 // pred_check
      _
    $region23: #{tpu_custom_call.1} parent=1 // pred_check_branch
      %1410 = sbr.rel (0) target = $region25
    $region24: #{tpu_custom_call.1} parent=1 // pred_region
      %s1412 = ssub.s32 32, 32
      %1413 = vsyncadd [#allocation4], %s1412
      %s1415 = sshll.u32 [#allocation7], 4
      %s1416 = int_to_ptr.vmem [resolvable:$true] %s1415
      %1418 = dma.vmem_to_hbm [thread:$0]  %s1416, 32, %s3, [#allocation4]
    $region25: #{tpu_custom_call.1} parent=1 // pred_fallthru
      _
    // Predicated region
    $region26: #{tpu_custom_call.1} parent=1 // pred_check
      _
    $region27: #{tpu_custom_call.1} parent=1 // pred_check_branch
      %1420 = sbr.rel (0) target = $region29
    $region28: #{tpu_custom_call.1} parent=1 // pred_region
      %1421 = dma.done [#allocation4], 32
    $region29: #{tpu_custom_call.1} parent=1 // pred_fallthru
      _
    %1422 = vsyncpa [#allocation3], 1
    %1423 = vsyncpa [#allocation6], 1
    %1424 = vsyncpa [#allocation4], 1

</llo_original>
